<compile_context>
chip_gen: v5e
topology: v5e:2x2
jax: 0.10.0
libtpu: 0.0.40
codegen_flags: <defaults>
</compile_context>

<pallas_src>
import jax
import jax.numpy as jnp
from jax import lax
from jax.experimental import pallas as pl
from jax.experimental.pallas import tpu as pltpu

KSIZE = 7
PAD = (KSIZE - 1) // 2  # 3


def _ceil_to(v, m):
    return -(-v // m) * m


def _pick_tile_n(n, per_image_bytes, max_tile=2, target_bytes=1 << 18):
    """Largest divisor of n (<= max_tile, block <= target) leaving >=2 steps."""
    cap = int(max(1, min(max_tile, target_bytes // max(per_image_bytes, 1))))
    divisors = [t for t in range(1, min(n, cap) + 1) if n % t == 0]
    for t in sorted(divisors, reverse=True):
        if n // t >= 2:          # keep >= 2 grid steps for v7x megacore
            return t
    return divisors[-1] if divisors else 1


def _vmem_budget_bytes(tile_n, C, HW, HWP, itemsize):
    block = tile_n * _ceil_to(C, 8) * _ceil_to(HW, 128) * itemsize
    scratch = 2 * tile_n * 8 * _ceil_to(HWP, 128) * 4
    col = 8 * _ceil_to(HW, 128) * 4
    need = 2 * 2 * block + scratch + 2 * col + (2 << 20)   # in+out, double-buffered
    return int(min(max(need, 32 << 20), 64 << 20))


def _make_spatial_gate_kernel(tile_n, C, H, W):
    HW = H * W
    OFF = PAD * (W + 1)          # left zero-pad length in flat coordinates
    HWP = HW + 2 * OFF           # padded flat map length

    def kernel(x_ref, col_ref, w_ref, b_ref, o_ref, pmx_ref, pmn_ref):
        # x_ref  : (tile_n, C, HW)   lane-dense bulk input block (VMEM)
        # col_ref: (1, 1, HW) int32  col_ref[0,0,i] == i % W
        # w_ref  : (2*49,)  SMEM     conv weights flattened as c*49 + kh*7 + kw
        # b_ref  : (1,)     SMEM     conv bias
        # o_ref  : (tile_n, C, HW)   output block (VMEM)
        # pmx_ref/pmn_ref: (tile_n, 1, HWP) f32 scratch; zero-padded flat maps

        xf = x_ref[...].astype(jnp.float32)                 # (tile_n, C, HW)

        # --- channel compress (single pass over the block) ----------------
        mx = jnp.max(xf, axis=1, keepdims=True)             # (tile_n, 1, HW)
        mn = jnp.mean(xf, axis=1, keepdims=True)            # (tile_n, 1, HW)

        # --- scatter into zero-padded flat buffers -------------------------
        # Border zeros reproduce the conv's zero padding; row-out-of-range
        # taps land in these zero regions, column-out-of-range taps are
        # masked below.
        pmx_ref[...] = jnp.zeros_like(pmx_ref)
        pmn_ref[...] = jnp.zeros_like(pmn_ref)
        pmx_ref[:, :, OFF:OFF + HW] = mx
        pmn_ref[:, :, OFF:OFF + HW] = mn
        pmx = pmx_ref[...]                                   # (tile_n, 1, HWP)
        pmn = pmn_ref[...]

        col = col_ref[...]                                   # (1, 1, HW) int32

        # --- 7x7 conv (2 in-ch -> 1 out-ch) as shift + MAC on the VPU ------
        # Output flat position i (= h*W + w) reads padded[i + kh*W + kw].
        # Column validity (0 <= w + kw - PAD < W) depends only on kw, so the
        # mask/select is applied once per (map, kw): 14 selects total.
        # Four independent accumulators keep the VALU slots busy.
        accs = [jnp.zeros((tile_n, 1, HW), jnp.float32) for _ in range(4)]
        for kw in range(KSIZE):
            dw = kw - PAD
            s_mx = w_ref[kw] * pmx[:, :, kw:kw + HW]                       # kh = 0
            s_mn = w_ref[KSIZE * KSIZE + kw] * pmn[:, :, kw:kw + HW]
            for kh in range(1, KSIZE):
                off = kh * W + kw
                s_mx = s_mx + w_ref[kh * KSIZE + kw] * pmx[:, :, off:off + HW]
                s_mn = s_mn + w_ref[KSIZE * KSIZE + kh * KSIZE + kw] * \
                    pmn[:, :, off:off + HW]
            if dw < 0:
                valid = col >= (-dw)
            elif dw > 0:
                valid = col < (W - dw)
            else:
                valid = None
            if valid is not None:
                s_mx = jnp.where(valid, s_mx, 0.0)
                s_mn = jnp.where(valid, s_mn, 0.0)
            accs[(2 * kw) % 4] = accs[(2 * kw) % 4] + s_mx
            accs[(2 * kw + 1) % 4] = accs[(2 * kw + 1) % 4] + s_mn

        conv = (accs[0] + accs[1]) + (accs[2] + accs[3]) + b_ref[0]
        scale = jax.nn.sigmoid(conv)                         # (tile_n, 1, HW)

        # --- gate: one dense broadcast-multiply + full-width store ---------
        # Re-load x from VMEM so the bulk block is not kept live in vregs
        # across the conv phase.
        o_ref[...] = (x_ref[...].astype(jnp.float32) * scale).astype(o_ref.dtype)

    return kernel


def spatial_gate(x, weight, bias):
    """x: (N, C, H, W); weight: (1, 2, 7, 7) OIHW; bias: (1,)."""
    N, C, H, W = x.shape
    HW = H * W
    OFF = PAD * (W + 1)
    HWP = HW + 2 * OFF

    x_flat = x.reshape(N, C, HW)                             # lane-dense view
    w_flat = weight.reshape(-1).astype(jnp.float32)          # c*49 + kh*7 + kw
    b = bias.astype(jnp.float32)
    col_idx = (jnp.arange(HW, dtype=jnp.int32) % W).reshape(1, 1, HW)

    tile_n = _pick_tile_n(N, C * HW * x.dtype.itemsize)
    grid = (N // tile_n,)
    vmem_limit = _vmem_budget_bytes(tile_n, C, HW, HWP, x.dtype.itemsize)
    # TODO(synk): for production feature maps whose (C, H*W) block overflows
    # the v7x 64 MiB VMEM, add a C-tile "arbitrary" grid axis with running
    # max/sum accumulators instead of whole-image blocks.

    kernel = _make_spatial_gate_kernel(tile_n, C, H, W)
    out_flat = pl.pallas_call(
        kernel,
        out_shape=jax.ShapeDtypeStruct((N, C, HW), x.dtype),
        grid=grid,
        in_specs=[
            pl.BlockSpec((tile_n, C, HW), lambda n: (n, 0, 0)),
            pl.BlockSpec((1, 1, HW), lambda n: (0, 0, 0)),
            pl.BlockSpec(memory_space=pltpu.SMEM),           # conv weights
            pl.BlockSpec(memory_space=pltpu.SMEM),           # conv bias
        ],
        out_specs=pl.BlockSpec((tile_n, C, HW), lambda n: (n, 0, 0)),
        scratch_shapes=[
            pltpu.VMEM((tile_n, 1, HWP), jnp.float32),       # padded max map
            pltpu.VMEM((tile_n, 1, HWP), jnp.float32),       # padded mean map
        ],
        compiler_params=pltpu.CompilerParams(
            dimension_semantics=("parallel",),
            vmem_limit_bytes=vmem_limit,
        ),
    )(x_flat, col_idx, w_flat, b)
    return out_flat.reshape(N, C, H, W)


def spatial_gate_reference(x, weight, bias):
    """Pure-JAX reference matching the PyTorch forward exactly."""
    compress = jnp.concatenate(
        [jnp.max(x, axis=1, keepdims=True), jnp.mean(x, axis=1, keepdims=True)],
        axis=1)
    conv = lax.conv_general_dilated(
        compress, weight, window_strides=(1, 1),
        padding=[(PAD, PAD), (PAD, PAD)],
        dimension_numbers=("NCHW", "OIHW", "NCHW"),
    ) + bias.reshape(1, 1, 1, 1)
    return x * jax.nn.sigmoid(conv)


if __name__ == "__main__":
    key = jax.random.PRNGKey(0)
    kx, kw, kb = jax.random.split(key, 3)

    N, C, H, W = 2, 4, 16, 16
    x = jax.random.normal(kx, (N, C, H, W), dtype=jnp.float32)

    # Deterministic synthetic Conv2d(2, 1, 7, padding=3) parameters (OIHW).
    fan_in = 2 * KSIZE * KSIZE
    bound = 1.0 / (fan_in ** 0.5)
    weight = jax.random.uniform(kw, (1, 2, KSIZE, KSIZE), jnp.float32,
                                minval=-bound, maxval=bound)
    bias = jax.random.uniform(kb, (1,), jnp.float32, minval=-bound, maxval=bound)

    out = jax.block_until_ready(spatial_gate(x, weight, bias))
    ref = jax.block_until_ready(spatial_gate_reference(x, weight, bias))

    assert out.shape == x.shape and out.dtype == x.dtype
    assert jnp.allclose(out, ref, atol=1e-5, rtol=1e-5), \
        f"max abs err {jnp.max(jnp.abs(out - ref))}"
    print("KERNEL_OK")
</pallas_src>

<mosaic_0001>
module attributes {stable_mosaic.version = 11 : i64} {
  func.func @kernel(%arg0: i32, %arg1: memref<1x4x256xf32, #tpu.memory_space<vmem>>, %arg2: memref<1x1x256xi32, #tpu.memory_space<vmem>>, %arg3: memref<98xf32, #tpu.memory_space<smem>>, %arg4: memref<1xf32, #tpu.memory_space<smem>>, %arg5: memref<1x4x256xf32, #tpu.memory_space<vmem>>, %arg6: memref<1x1x358xf32, #tpu.memory_space<vmem>>, %arg7: memref<1x1x358xf32, #tpu.memory_space<vmem>>) attributes {dimension_semantics = [#tpu.dimension_semantics<parallel>], iteration_bounds = array<i64: 2>, scalar_prefetch = 0 : i64, scratch_operands = 2 : i64, tpu.core_type = #tpu.core_type<tc>, window_params = [{transform_indices = @transform_0, window_bounds = array<i64: 1, 4, 256>}, {pipeline_mode = #tpu.pipeline_mode<synchronous>, transform_indices = @transform_1, window_bounds = array<i64: 1, 1, 256>}, {transform_indices = @transform_2, window_bounds = array<i64: 98>}, {transform_indices = @transform_3, window_bounds = array<i64: 1>}, {transform_indices = @transform_4, window_bounds = array<i64: 1, 4, 256>}]} {
    %c0 = arith.constant 0 : index
    %c0_0 = arith.constant 0 : index
    %c0_1 = arith.constant 0 : index
    %0 = vector.load %arg1[%c0, %c0_0, %c0_1] : memref<1x4x256xf32, #tpu.memory_space<vmem>>, vector<1x4x256xf32>
    %cst = arith.constant dense<0xFF800000> : vector<1x256xf32>
    %1 = vector.multi_reduction <maximumf>, %0, %cst [1] : vector<1x4x256xf32> to vector<1x256xf32>
    %2 = vector.shape_cast %1 : vector<1x256xf32> to vector<1x1x256xf32>
    %cst_2 = arith.constant dense<0.000000e+00> : vector<1x256xf32>
    %3 = vector.multi_reduction <add>, %0, %cst_2 [1] : vector<1x4x256xf32> to vector<1x256xf32>
    %4 = vector.shape_cast %3 : vector<1x256xf32> to vector<1x1x256xf32>
    %cst_3 = arith.constant 4.000000e+00 : f32
    %5 = vector.broadcast %cst_3 : f32 to vector<1x1x256xf32>
    %6 = arith.divf %4, %5 : vector<1x1x256xf32>
    %cst_4 = arith.constant 0.000000e+00 : f32
    %7 = vector.broadcast %cst_4 : f32 to vector<1x1x358xf32>
    %c0_5 = arith.constant 0 : index
    %c0_6 = arith.constant 0 : index
    %c0_7 = arith.constant 0 : index
    %8 = vector.load %arg6[%c0_5, %c0_6, %c0_7] : memref<1x1x358xf32, #tpu.memory_space<vmem>>, vector<1x1x358xf32>
    tpu.vector_store %arg6[%c0_5, %c0_6, %c0_7], %7 {strides = array<i32>} : memref<1x1x358xf32, #tpu.memory_space<vmem>>, vector<1x1x358xf32>,
    %cst_8 = arith.constant 0.000000e+00 : f32
    %9 = vector.broadcast %cst_8 : f32 to vector<1x1x358xf32>
    %c0_9 = arith.constant 0 : index
    %c0_10 = arith.constant 0 : index
    %c0_11 = arith.constant 0 : index
    %10 = vector.load %arg7[%c0_9, %c0_10, %c0_11] : memref<1x1x358xf32, #tpu.memory_space<vmem>>, vector<1x1x358xf32>
    tpu.vector_store %arg7[%c0_9, %c0_10, %c0_11], %9 {strides = array<i32>} : memref<1x1x358xf32, #tpu.memory_space<vmem>>, vector<1x1x358xf32>,
    %c0_12 = arith.constant 0 : index
    %c0_13 = arith.constant 0 : index
    %c51 = arith.constant 51 : index
    %11 = vector.load %arg6[%c0_12, %c0_13, %c51] : memref<1x1x358xf32, #tpu.memory_space<vmem>>, vector<1x1x256xf32>
    tpu.vector_store %arg6[%c0_12, %c0_13, %c51], %2 {strides = array<i32>} : memref<1x1x358xf32, #tpu.memory_space<vmem>>, vector<1x1x256xf32>,
    %c0_14 = arith.constant 0 : index
    %c0_15 = arith.constant 0 : index
    %c51_16 = arith.constant 51 : index
    %12 = vector.load %arg7[%c0_14, %c0_15, %c51_16] : memref<1x1x358xf32, #tpu.memory_space<vmem>>, vector<1x1x256xf32>
    tpu.vector_store %arg7[%c0_14, %c0_15, %c51_16], %6 {strides = array<i32>} : memref<1x1x358xf32, #tpu.memory_space<vmem>>, vector<1x1x256xf32>,
    %c0_17 = arith.constant 0 : index
    %c0_18 = arith.constant 0 : index
    %c0_19 = arith.constant 0 : index
    %13 = vector.load %arg6[%c0_17, %c0_18, %c0_19] : memref<1x1x358xf32, #tpu.memory_space<vmem>>, vector<1x1x358xf32>
    %c0_20 = arith.constant 0 : index
    %c0_21 = arith.constant 0 : index
    %c0_22 = arith.constant 0 : index
    %14 = vector.load %arg7[%c0_20, %c0_21, %c0_22] : memref<1x1x358xf32, #tpu.memory_space<vmem>>, vector<1x1x358xf32>
    %c0_23 = arith.constant 0 : index
    %c0_24 = arith.constant 0 : index
    %c0_25 = arith.constant 0 : index
    %15 = vector.load %arg2[%c0_23, %c0_24, %c0_25] : memref<1x1x256xi32, #tpu.memory_space<vmem>>, vector<1x1x256xi32>
    %cst_26 = arith.constant 0.000000e+00 : f32
    %16 = vector.broadcast %cst_26 : f32 to vector<1x1x256xf32>
    %cst_27 = arith.constant 0.000000e+00 : f32
    %17 = vector.broadcast %cst_27 : f32 to vector<1x1x256xf32>
    %cst_28 = arith.constant 0.000000e+00 : f32
    %18 = vector.broadcast %cst_28 : f32 to vector<1x1x256xf32>
    %cst_29 = arith.constant 0.000000e+00 : f32
    %19 = vector.broadcast %cst_29 : f32 to vector<1x1x256xf32>
    %c0_30 = arith.constant 0 : index
    %20 = memref.load %arg3[%c0_30] : memref<98xf32, #tpu.memory_space<smem>>
    %21 = vector.extract_strided_slice %13 {offsets = [0, 0, 0], sizes = [1, 1, 256], strides = [1, 1, 1]} : vector<1x1x358xf32> to vector<1x1x256xf32>
    %22 = vector.broadcast %20 : f32 to vector<1x1x256xf32>
    %23 = arith.mulf %22, %21 : vector<1x1x256xf32>
    %c49 = arith.constant 49 : index
    %24 = memref.load %arg3[%c49] : memref<98xf32, #tpu.memory_space<smem>>
    %25 = vector.extract_strided_slice %14 {offsets = [0, 0, 0], sizes = [1, 1, 256], strides = [1, 1, 1]} : vector<1x1x358xf32> to vector<1x1x256xf32>
    %26 = vector.broadcast %24 : f32 to vector<1x1x256xf32>
    %27 = arith.mulf %26, %25 : vector<1x1x256xf32>
    %c7 = arith.constant 7 : index
    %28 = memref.load %arg3[%c7] : memref<98xf32, #tpu.memory_space<smem>>
    %29 = vector.extract_strided_slice %13 {offsets = [0, 0, 16], sizes = [1, 1, 256], strides = [1, 1, 1]} : vector<1x1x358xf32> to vector<1x1x256xf32>
    %30 = vector.broadcast %28 : f32 to vector<1x1x256xf32>
    %31 = arith.mulf %30, %29 : vector<1x1x256xf32>
    %32 = arith.addf %23, %31 : vector<1x1x256xf32>
    %c56 = arith.constant 56 : index
    %33 = memref.load %arg3[%c56] : memref<98xf32, #tpu.memory_space<smem>>
    %34 = vector.extract_strided_slice %14 {offsets = [0, 0, 16], sizes = [1, 1, 256], strides = [1, 1, 1]} : vector<1x1x358xf32> to vector<1x1x256xf32>
    %35 = vector.broadcast %33 : f32 to vector<1x1x256xf32>
    %36 = arith.mulf %35, %34 : vector<1x1x256xf32>
    %37 = arith.addf %27, %36 : vector<1x1x256xf32>
    %c14 = arith.constant 14 : index
    %38 = memref.load %arg3[%c14] : memref<98xf32, #tpu.memory_space<smem>>
    %39 = vector.extract_strided_slice %13 {offsets = [0, 0, 32], sizes = [1, 1, 256], strides = [1, 1, 1]} : vector<1x1x358xf32> to vector<1x1x256xf32>
    %40 = vector.broadcast %38 : f32 to vector<1x1x256xf32>
    %41 = arith.mulf %40, %39 : vector<1x1x256xf32>
    %42 = arith.addf %32, %41 : vector<1x1x256xf32>
    %c63 = arith.constant 63 : index
    %43 = memref.load %arg3[%c63] : memref<98xf32, #tpu.memory_space<smem>>
    %44 = vector.extract_strided_slice %14 {offsets = [0, 0, 32], sizes = [1, 1, 256], strides = [1, 1, 1]} : vector<1x1x358xf32> to vector<1x1x256xf32>
    %45 = vector.broadcast %43 : f32 to vector<1x1x256xf32>
    %46 = arith.mulf %45, %44 : vector<1x1x256xf32>
    %47 = arith.addf %37, %46 : vector<1x1x256xf32>
    %c21 = arith.constant 21 : index
    %48 = memref.load %arg3[%c21] : memref<98xf32, #tpu.memory_space<smem>>
    %49 = vector.extract_strided_slice %13 {offsets = [0, 0, 48], sizes = [1, 1, 256], strides = [1, 1, 1]} : vector<1x1x358xf32> to vector<1x1x256xf32>
    %50 = vector.broadcast %48 : f32 to vector<1x1x256xf32>
    %51 = arith.mulf %50, %49 : vector<1x1x256xf32>
    %52 = arith.addf %42, %51 : vector<1x1x256xf32>
    %c70 = arith.constant 70 : index
    %53 = memref.load %arg3[%c70] : memref<98xf32, #tpu.memory_space<smem>>
    %54 = vector.extract_strided_slice %14 {offsets = [0, 0, 48], sizes = [1, 1, 256], strides = [1, 1, 1]} : vector<1x1x358xf32> to vector<1x1x256xf32>
    %55 = vector.broadcast %53 : f32 to vector<1x1x256xf32>
    %56 = arith.mulf %55, %54 : vector<1x1x256xf32>
    %57 = arith.addf %47, %56 : vector<1x1x256xf32>
    %c28 = arith.constant 28 : index
    %58 = memref.load %arg3[%c28] : memref<98xf32, #tpu.memory_space<smem>>
    %59 = vector.extract_strided_slice %13 {offsets = [0, 0, 64], sizes = [1, 1, 256], strides = [1, 1, 1]} : vector<1x1x358xf32> to vector<1x1x256xf32>
    %60 = vector.broadcast %58 : f32 to vector<1x1x256xf32>
    %61 = arith.mulf %60, %59 : vector<1x1x256xf32>
    %62 = arith.addf %52, %61 : vector<1x1x256xf32>
    %c77 = arith.constant 77 : index
    %63 = memref.load %arg3[%c77] : memref<98xf32, #tpu.memory_space<smem>>
    %64 = vector.extract_strided_slice %14 {offsets = [0, 0, 64], sizes = [1, 1, 256], strides = [1, 1, 1]} : vector<1x1x358xf32> to vector<1x1x256xf32>
    %65 = vector.broadcast %63 : f32 to vector<1x1x256xf32>
    %66 = arith.mulf %65, %64 : vector<1x1x256xf32>
    %67 = arith.addf %57, %66 : vector<1x1x256xf32>
    %c35 = arith.constant 35 : index
    %68 = memref.load %arg3[%c35] : memref<98xf32, #tpu.memory_space<smem>>
    %69 = vector.extract_strided_slice %13 {offsets = [0, 0, 80], sizes = [1, 1, 256], strides = [1, 1, 1]} : vector<1x1x358xf32> to vector<1x1x256xf32>
    %70 = vector.broadcast %68 : f32 to vector<1x1x256xf32>
    %71 = arith.mulf %70, %69 : vector<1x1x256xf32>
    %72 = arith.addf %62, %71 : vector<1x1x256xf32>
    %c84 = arith.constant 84 : index
    %73 = memref.load %arg3[%c84] : memref<98xf32, #tpu.memory_space<smem>>
    %74 = vector.extract_strided_slice %14 {offsets = [0, 0, 80], sizes = [1, 1, 256], strides = [1, 1, 1]} : vector<1x1x358xf32> to vector<1x1x256xf32>
    %75 = vector.broadcast %73 : f32 to vector<1x1x256xf32>
    %76 = arith.mulf %75, %74 : vector<1x1x256xf32>
    %77 = arith.addf %67, %76 : vector<1x1x256xf32>
    %c42 = arith.constant 42 : index
    %78 = memref.load %arg3[%c42] : memref<98xf32, #tpu.memory_space<smem>>
    %79 = vector.extract_strided_slice %13 {offsets = [0, 0, 96], sizes = [1, 1, 256], strides = [1, 1, 1]} : vector<1x1x358xf32> to vector<1x1x256xf32>
    %80 = vector.broadcast %78 : f32 to vector<1x1x256xf32>
    %81 = arith.mulf %80, %79 : vector<1x1x256xf32>
    %82 = arith.addf %72, %81 : vector<1x1x256xf32>
    %c91 = arith.constant 91 : index
    %83 = memref.load %arg3[%c91] : memref<98xf32, #tpu.memory_space<smem>>
    %84 = vector.extract_strided_slice %14 {offsets = [0, 0, 96], sizes = [1, 1, 256], strides = [1, 1, 1]} : vector<1x1x358xf32> to vector<1x1x256xf32>
    %85 = vector.broadcast %83 : f32 to vector<1x1x256xf32>
    %86 = arith.mulf %85, %84 : vector<1x1x256xf32>
    %87 = arith.addf %77, %86 : vector<1x1x256xf32>
    %c3_i32 = arith.constant 3 : i32
    %88 = vector.broadcast %c3_i32 : i32 to vector<1x1x256xi32>
    %89 = arith.cmpi sge, %15, %88 : vector<1x1x256xi32>
    %cst_31 = arith.constant 0.000000e+00 : f32
    %90 = vector.broadcast %cst_31 : f32 to vector<1x1x256xf32>
    %91 = arith.select %89, %82, %90 : vector<1x1x256xi1>, vector<1x1x256xf32>
    %cst_32 = arith.constant 0.000000e+00 : f32
    %92 = vector.broadcast %cst_32 : f32 to vector<1x1x256xf32>
    %93 = arith.select %89, %87, %92 : vector<1x1x256xi1>, vector<1x1x256xf32>
    %94 = arith.addf %16, %91 : vector<1x1x256xf32>
    %95 = arith.addf %17, %93 : vector<1x1x256xf32>
    %c1 = arith.constant 1 : index
    %96 = memref.load %arg3[%c1] : memref<98xf32, #tpu.memory_space<smem>>
    %97 = vector.extract_strided_slice %13 {offsets = [0, 0, 1], sizes = [1, 1, 256], strides = [1, 1, 1]} : vector<1x1x358xf32> to vector<1x1x256xf32>
    %98 = vector.broadcast %96 : f32 to vector<1x1x256xf32>
    %99 = arith.mulf %98, %97 : vector<1x1x256xf32>
    %c50 = arith.constant 50 : index
    %100 = memref.load %arg3[%c50] : memref<98xf32, #tpu.memory_space<smem>>
    %101 = vector.extract_strided_slice %14 {offsets = [0, 0, 1], sizes = [1, 1, 256], strides = [1, 1, 1]} : vector<1x1x358xf32> to vector<1x1x256xf32>
    %102 = vector.broadcast %100 : f32 to vector<1x1x256xf32>
    %103 = arith.mulf %102, %101 : vector<1x1x256xf32>
    %c8 = arith.constant 8 : index
    %104 = memref.load %arg3[%c8] : memref<98xf32, #tpu.memory_space<smem>>
    %105 = vector.extract_strided_slice %13 {offsets = [0, 0, 17], sizes = [1, 1, 256], strides = [1, 1, 1]} : vector<1x1x358xf32> to vector<1x1x256xf32>
    %106 = vector.broadcast %104 : f32 to vector<1x1x256xf32>
    %107 = arith.mulf %106, %105 : vector<1x1x256xf32>
    %108 = arith.addf %99, %107 : vector<1x1x256xf32>
    %c57 = arith.constant 57 : index
    %109 = memref.load %arg3[%c57] : memref<98xf32, #tpu.memory_space<smem>>
    %110 = vector.extract_strided_slice %14 {offsets = [0, 0, 17], sizes = [1, 1, 256], strides = [1, 1, 1]} : vector<1x1x358xf32> to vector<1x1x256xf32>
    %111 = vector.broadcast %109 : f32 to vector<1x1x256xf32>
    %112 = arith.mulf %111, %110 : vector<1x1x256xf32>
    %113 = arith.addf %103, %112 : vector<1x1x256xf32>
    %c15 = arith.constant 15 : index
    %114 = memref.load %arg3[%c15] : memref<98xf32, #tpu.memory_space<smem>>
    %115 = vector.extract_strided_slice %13 {offsets = [0, 0, 33], sizes = [1, 1, 256], strides = [1, 1, 1]} : vector<1x1x358xf32> to vector<1x1x256xf32>
    %116 = vector.broadcast %114 : f32 to vector<1x1x256xf32>
    %117 = arith.mulf %116, %115 : vector<1x1x256xf32>
    %118 = arith.addf %108, %117 : vector<1x1x256xf32>
    %c64 = arith.constant 64 : index
    %119 = memref.load %arg3[%c64] : memref<98xf32, #tpu.memory_space<smem>>
    %120 = vector.extract_strided_slice %14 {offsets = [0, 0, 33], sizes = [1, 1, 256], strides = [1, 1, 1]} : vector<1x1x358xf32> to vector<1x1x256xf32>
    %121 = vector.broadcast %119 : f32 to vector<1x1x256xf32>
    %122 = arith.mulf %121, %120 : vector<1x1x256xf32>
    %123 = arith.addf %113, %122 : vector<1x1x256xf32>
    %c22 = arith.constant 22 : index
    %124 = memref.load %arg3[%c22] : memref<98xf32, #tpu.memory_space<smem>>
    %125 = vector.extract_strided_slice %13 {offsets = [0, 0, 49], sizes = [1, 1, 256], strides = [1, 1, 1]} : vector<1x1x358xf32> to vector<1x1x256xf32>
    %126 = vector.broadcast %124 : f32 to vector<1x1x256xf32>
    %127 = arith.mulf %126, %125 : vector<1x1x256xf32>
    %128 = arith.addf %118, %127 : vector<1x1x256xf32>
    %c71 = arith.constant 71 : index
    %129 = memref.load %arg3[%c71] : memref<98xf32, #tpu.memory_space<smem>>
    %130 = vector.extract_strided_slice %14 {offsets = [0, 0, 49], sizes = [1, 1, 256], strides = [1, 1, 1]} : vector<1x1x358xf32> to vector<1x1x256xf32>
    %131 = vector.broadcast %129 : f32 to vector<1x1x256xf32>
    %132 = arith.mulf %131, %130 : vector<1x1x256xf32>
    %133 = arith.addf %123, %132 : vector<1x1x256xf32>
    %c29 = arith.constant 29 : index
    %134 = memref.load %arg3[%c29] : memref<98xf32, #tpu.memory_space<smem>>
    %135 = vector.extract_strided_slice %13 {offsets = [0, 0, 65], sizes = [1, 1, 256], strides = [1, 1, 1]} : vector<1x1x358xf32> to vector<1x1x256xf32>
    %136 = vector.broadcast %134 : f32 to vector<1x1x256xf32>
    %137 = arith.mulf %136, %135 : vector<1x1x256xf32>
    %138 = arith.addf %128, %137 : vector<1x1x256xf32>
    %c78 = arith.constant 78 : index
    %139 = memref.load %arg3[%c78] : memref<98xf32, #tpu.memory_space<smem>>
    %140 = vector.extract_strided_slice %14 {offsets = [0, 0, 65], sizes = [1, 1, 256], strides = [1, 1, 1]} : vector<1x1x358xf32> to vector<1x1x256xf32>
    %141 = vector.broadcast %139 : f32 to vector<1x1x256xf32>
    %142 = arith.mulf %141, %140 : vector<1x1x256xf32>
    %143 = arith.addf %133, %142 : vector<1x1x256xf32>
    %c36 = arith.constant 36 : index
    %144 = memref.load %arg3[%c36] : memref<98xf32, #tpu.memory_space<smem>>
    %145 = vector.extract_strided_slice %13 {offsets = [0, 0, 81], sizes = [1, 1, 256], strides = [1, 1, 1]} : vector<1x1x358xf32> to vector<1x1x256xf32>
    %146 = vector.broadcast %144 : f32 to vector<1x1x256xf32>
    %147 = arith.mulf %146, %145 : vector<1x1x256xf32>
    %148 = arith.addf %138, %147 : vector<1x1x256xf32>
    %c85 = arith.constant 85 : index
    %149 = memref.load %arg3[%c85] : memref<98xf32, #tpu.memory_space<smem>>
    %150 = vector.extract_strided_slice %14 {offsets = [0, 0, 81], sizes = [1, 1, 256], strides = [1, 1, 1]} : vector<1x1x358xf32> to vector<1x1x256xf32>
    %151 = vector.broadcast %149 : f32 to vector<1x1x256xf32>
    %152 = arith.mulf %151, %150 : vector<1x1x256xf32>
    %153 = arith.addf %143, %152 : vector<1x1x256xf32>
    %c43 = arith.constant 43 : index
    %154 = memref.load %arg3[%c43] : memref<98xf32, #tpu.memory_space<smem>>
    %155 = vector.extract_strided_slice %13 {offsets = [0, 0, 97], sizes = [1, 1, 256], strides = [1, 1, 1]} : vector<1x1x358xf32> to vector<1x1x256xf32>
    %156 = vector.broadcast %154 : f32 to vector<1x1x256xf32>
    %157 = arith.mulf %156, %155 : vector<1x1x256xf32>
    %158 = arith.addf %148, %157 : vector<1x1x256xf32>
    %c92 = arith.constant 92 : index
    %159 = memref.load %arg3[%c92] : memref<98xf32, #tpu.memory_space<smem>>
    %160 = vector.extract_strided_slice %14 {offsets = [0, 0, 97], sizes = [1, 1, 256], strides = [1, 1, 1]} : vector<1x1x358xf32> to vector<1x1x256xf32>
    %161 = vector.broadcast %159 : f32 to vector<1x1x256xf32>
    %162 = arith.mulf %161, %160 : vector<1x1x256xf32>
    %163 = arith.addf %153, %162 : vector<1x1x256xf32>
    %c2_i32 = arith.constant 2 : i32
    %164 = vector.broadcast %c2_i32 : i32 to vector<1x1x256xi32>
    %165 = arith.cmpi sge, %15, %164 : vector<1x1x256xi32>
    %cst_33 = arith.constant 0.000000e+00 : f32
    %166 = vector.broadcast %cst_33 : f32 to vector<1x1x256xf32>
    %167 = arith.select %165, %158, %166 : vector<1x1x256xi1>, vector<1x1x256xf32>
    %cst_34 = arith.constant 0.000000e+00 : f32
    %168 = vector.broadcast %cst_34 : f32 to vector<1x1x256xf32>
    %169 = arith.select %165, %163, %168 : vector<1x1x256xi1>, vector<1x1x256xf32>
    %170 = arith.addf %18, %167 : vector<1x1x256xf32>
    %171 = arith.addf %19, %169 : vector<1x1x256xf32>
    %c2 = arith.constant 2 : index
    %172 = memref.load %arg3[%c2] : memref<98xf32, #tpu.memory_space<smem>>
    %173 = vector.extract_strided_slice %13 {offsets = [0, 0, 2], sizes = [1, 1, 256], strides = [1, 1, 1]} : vector<1x1x358xf32> to vector<1x1x256xf32>
    %174 = vector.broadcast %172 : f32 to vector<1x1x256xf32>
    %175 = arith.mulf %174, %173 : vector<1x1x256xf32>
    %c51_35 = arith.constant 51 : index
    %176 = memref.load %arg3[%c51_35] : memref<98xf32, #tpu.memory_space<smem>>
    %177 = vector.extract_strided_slice %14 {offsets = [0, 0, 2], sizes = [1, 1, 256], strides = [1, 1, 1]} : vector<1x1x358xf32> to vector<1x1x256xf32>
    %178 = vector.broadcast %176 : f32 to vector<1x1x256xf32>
    %179 = arith.mulf %178, %177 : vector<1x1x256xf32>
    %c9 = arith.constant 9 : index
    %180 = memref.load %arg3[%c9] : memref<98xf32, #tpu.memory_space<smem>>
    %181 = vector.extract_strided_slice %13 {offsets = [0, 0, 18], sizes = [1, 1, 256], strides = [1, 1, 1]} : vector<1x1x358xf32> to vector<1x1x256xf32>
    %182 = vector.broadcast %180 : f32 to vector<1x1x256xf32>
    %183 = arith.mulf %182, %181 : vector<1x1x256xf32>
    %184 = arith.addf %175, %183 : vector<1x1x256xf32>
    %c58 = arith.constant 58 : index
    %185 = memref.load %arg3[%c58] : memref<98xf32, #tpu.memory_space<smem>>
    %186 = vector.extract_strided_slice %14 {offsets = [0, 0, 18], sizes = [1, 1, 256], strides = [1, 1, 1]} : vector<1x1x358xf32> to vector<1x1x256xf32>
    %187 = vector.broadcast %185 : f32 to vector<1x1x256xf32>
    %188 = arith.mulf %187, %186 : vector<1x1x256xf32>
    %189 = arith.addf %179, %188 : vector<1x1x256xf32>
    %c16 = arith.constant 16 : index
    %190 = memref.load %arg3[%c16] : memref<98xf32, #tpu.memory_space<smem>>
    %191 = vector.extract_strided_slice %13 {offsets = [0, 0, 34], sizes = [1, 1, 256], strides = [1, 1, 1]} : vector<1x1x358xf32> to vector<1x1x256xf32>
    %192 = vector.broadcast %190 : f32 to vector<1x1x256xf32>
    %193 = arith.mulf %192, %191 : vector<1x1x256xf32>
    %194 = arith.addf %184, %193 : vector<1x1x256xf32>
    %c65 = arith.constant 65 : index
    %195 = memref.load %arg3[%c65] : memref<98xf32, #tpu.memory_space<smem>>
    %196 = vector.extract_strided_slice %14 {offsets = [0, 0, 34], sizes = [1, 1, 256], strides = [1, 1, 1]} : vector<1x1x358xf32> to vector<1x1x256xf32>
    %197 = vector.broadcast %195 : f32 to vector<1x1x256xf32>
    %198 = arith.mulf %197, %196 : vector<1x1x256xf32>
    %199 = arith.addf %189, %198 : vector<1x1x256xf32>
    %c23 = arith.constant 23 : index
    %200 = memref.load %arg3[%c23] : memref<98xf32, #tpu.memory_space<smem>>
    %201 = vector.extract_strided_slice %13 {offsets = [0, 0, 50], sizes = [1, 1, 256], strides = [1, 1, 1]} : vector<1x1x358xf32> to vector<1x1x256xf32>
    %202 = vector.broadcast %200 : f32 to vector<1x1x256xf32>
    %203 = arith.mulf %202, %201 : vector<1x1x256xf32>
    %204 = arith.addf %194, %203 : vector<1x1x256xf32>
    %c72 = arith.constant 72 : index
    %205 = memref.load %arg3[%c72] : memref<98xf32, #tpu.memory_space<smem>>
    %206 = vector.extract_strided_slice %14 {offsets = [0, 0, 50], sizes = [1, 1, 256], strides = [1, 1, 1]} : vector<1x1x358xf32> to vector<1x1x256xf32>
    %207 = vector.broadcast %205 : f32 to vector<1x1x256xf32>
    %208 = arith.mulf %207, %206 : vector<1x1x256xf32>
    %209 = arith.addf %199, %208 : vector<1x1x256xf32>
    %c30 = arith.constant 30 : index
    %210 = memref.load %arg3[%c30] : memref<98xf32, #tpu.memory_space<smem>>
    %211 = vector.extract_strided_slice %13 {offsets = [0, 0, 66], sizes = [1, 1, 256], strides = [1, 1, 1]} : vector<1x1x358xf32> to vector<1x1x256xf32>
    %212 = vector.broadcast %210 : f32 to vector<1x1x256xf32>
    %213 = arith.mulf %212, %211 : vector<1x1x256xf32>
    %214 = arith.addf %204, %213 : vector<1x1x256xf32>
    %c79 = arith.constant 79 : index
    %215 = memref.load %arg3[%c79] : memref<98xf32, #tpu.memory_space<smem>>
    %216 = vector.extract_strided_slice %14 {offsets = [0, 0, 66], sizes = [1, 1, 256], strides = [1, 1, 1]} : vector<1x1x358xf32> to vector<1x1x256xf32>
    %217 = vector.broadcast %215 : f32 to vector<1x1x256xf32>
    %218 = arith.mulf %217, %216 : vector<1x1x256xf32>
    %219 = arith.addf %209, %218 : vector<1x1x256xf32>
    %c37 = arith.constant 37 : index
    %220 = memref.load %arg3[%c37] : memref<98xf32, #tpu.memory_space<smem>>
    %221 = vector.extract_strided_slice %13 {offsets = [0, 0, 82], sizes = [1, 1, 256], strides = [1, 1, 1]} : vector<1x1x358xf32> to vector<1x1x256xf32>
    %222 = vector.broadcast %220 : f32 to vector<1x1x256xf32>
    %223 = arith.mulf %222, %221 : vector<1x1x256xf32>
    %224 = arith.addf %214, %223 : vector<1x1x256xf32>
    %c86 = arith.constant 86 : index
    %225 = memref.load %arg3[%c86] : memref<98xf32, #tpu.memory_space<smem>>
    %226 = vector.extract_strided_slice %14 {offsets = [0, 0, 82], sizes = [1, 1, 256], strides = [1, 1, 1]} : vector<1x1x358xf32> to vector<1x1x256xf32>
    %227 = vector.broadcast %225 : f32 to vector<1x1x256xf32>
    %228 = arith.mulf %227, %226 : vector<1x1x256xf32>
    %229 = arith.addf %219, %228 : vector<1x1x256xf32>
    %c44 = arith.constant 44 : index
    %230 = memref.load %arg3[%c44] : memref<98xf32, #tpu.memory_space<smem>>
    %231 = vector.extract_strided_slice %13 {offsets = [0, 0, 98], sizes = [1, 1, 256], strides = [1, 1, 1]} : vector<1x1x358xf32> to vector<1x1x256xf32>
    %232 = vector.broadcast %230 : f32 to vector<1x1x256xf32>
    %233 = arith.mulf %232, %231 : vector<1x1x256xf32>
    %234 = arith.addf %224, %233 : vector<1x1x256xf32>
    %c93 = arith.constant 93 : index
    %235 = memref.load %arg3[%c93] : memref<98xf32, #tpu.memory_space<smem>>
    %236 = vector.extract_strided_slice %14 {offsets = [0, 0, 98], sizes = [1, 1, 256], strides = [1, 1, 1]} : vector<1x1x358xf32> to vector<1x1x256xf32>
    %237 = vector.broadcast %235 : f32 to vector<1x1x256xf32>
    %238 = arith.mulf %237, %236 : vector<1x1x256xf32>
    %239 = arith.addf %229, %238 : vector<1x1x256xf32>
    %c1_i32 = arith.constant 1 : i32
    %240 = vector.broadcast %c1_i32 : i32 to vector<1x1x256xi32>
    %241 = arith.cmpi sge, %15, %240 : vector<1x1x256xi32>
    %cst_36 = arith.constant 0.000000e+00 : f32
    %242 = vector.broadcast %cst_36 : f32 to vector<1x1x256xf32>
    %243 = arith.select %241, %234, %242 : vector<1x1x256xi1>, vector<1x1x256xf32>
    %cst_37 = arith.constant 0.000000e+00 : f32
    %244 = vector.broadcast %cst_37 : f32 to vector<1x1x256xf32>
    %245 = arith.select %241, %239, %244 : vector<1x1x256xi1>, vector<1x1x256xf32>
    %246 = arith.addf %94, %243 : vector<1x1x256xf32>
    %247 = arith.addf %95, %245 : vector<1x1x256xf32>
    %c3 = arith.constant 3 : index
    %248 = memref.load %arg3[%c3] : memref<98xf32, #tpu.memory_space<smem>>
    %249 = vector.extract_strided_slice %13 {offsets = [0, 0, 3], sizes = [1, 1, 256], strides = [1, 1, 1]} : vector<1x1x358xf32> to vector<1x1x256xf32>
    %250 = vector.broadcast %248 : f32 to vector<1x1x256xf32>
    %251 = arith.mulf %250, %249 : vector<1x1x256xf32>
    %c52 = arith.constant 52 : index
    %252 = memref.load %arg3[%c52] : memref<98xf32, #tpu.memory_space<smem>>
    %253 = vector.extract_strided_slice %14 {offsets = [0, 0, 3], sizes = [1, 1, 256], strides = [1, 1, 1]} : vector<1x1x358xf32> to vector<1x1x256xf32>
    %254 = vector.broadcast %252 : f32 to vector<1x1x256xf32>
    %255 = arith.mulf %254, %253 : vector<1x1x256xf32>
    %c10 = arith.constant 10 : index
    %256 = memref.load %arg3[%c10] : memref<98xf32, #tpu.memory_space<smem>>
    %257 = vector.extract_strided_slice %13 {offsets = [0, 0, 19], sizes = [1, 1, 256], strides = [1, 1, 1]} : vector<1x1x358xf32> to vector<1x1x256xf32>
    %258 = vector.broadcast %256 : f32 to vector<1x1x256xf32>
    %259 = arith.mulf %258, %257 : vector<1x1x256xf32>
    %260 = arith.addf %251, %259 : vector<1x1x256xf32>
    %c59 = arith.constant 59 : index
    %261 = memref.load %arg3[%c59] : memref<98xf32, #tpu.memory_space<smem>>
    %262 = vector.extract_strided_slice %14 {offsets = [0, 0, 19], sizes = [1, 1, 256], strides = [1, 1, 1]} : vector<1x1x358xf32> to vector<1x1x256xf32>
    %263 = vector.broadcast %261 : f32 to vector<1x1x256xf32>
    %264 = arith.mulf %263, %262 : vector<1x1x256xf32>
    %265 = arith.addf %255, %264 : vector<1x1x256xf32>
    %c17 = arith.constant 17 : index
    %266 = memref.load %arg3[%c17] : memref<98xf32, #tpu.memory_space<smem>>
    %267 = vector.extract_strided_slice %13 {offsets = [0, 0, 35], sizes = [1, 1, 256], strides = [1, 1, 1]} : vector<1x1x358xf32> to vector<1x1x256xf32>
    %268 = vector.broadcast %266 : f32 to vector<1x1x256xf32>
    %269 = arith.mulf %268, %267 : vector<1x1x256xf32>
    %270 = arith.addf %260, %269 : vector<1x1x256xf32>
    %c66 = arith.constant 66 : index
    %271 = memref.load %arg3[%c66] : memref<98xf32, #tpu.memory_space<smem>>
    %272 = vector.extract_strided_slice %14 {offsets = [0, 0, 35], sizes = [1, 1, 256], strides = [1, 1, 1]} : vector<1x1x358xf32> to vector<1x1x256xf32>
    %273 = vector.broadcast %271 : f32 to vector<1x1x256xf32>
    %274 = arith.mulf %273, %272 : vector<1x1x256xf32>
    %275 = arith.addf %265, %274 : vector<1x1x256xf32>
    %c24 = arith.constant 24 : index
    %276 = memref.load %arg3[%c24] : memref<98xf32, #tpu.memory_space<smem>>
    %277 = vector.extract_strided_slice %13 {offsets = [0, 0, 51], sizes = [1, 1, 256], strides = [1, 1, 1]} : vector<1x1x358xf32> to vector<1x1x256xf32>
    %278 = vector.broadcast %276 : f32 to vector<1x1x256xf32>
    %279 = arith.mulf %278, %277 : vector<1x1x256xf32>
    %280 = arith.addf %270, %279 : vector<1x1x256xf32>
    %c73 = arith.constant 73 : index
    %281 = memref.load %arg3[%c73] : memref<98xf32, #tpu.memory_space<smem>>
    %282 = vector.extract_strided_slice %14 {offsets = [0, 0, 51], sizes = [1, 1, 256], strides = [1, 1, 1]} : vector<1x1x358xf32> to vector<1x1x256xf32>
    %283 = vector.broadcast %281 : f32 to vector<1x1x256xf32>
    %284 = arith.mulf %283, %282 : vector<1x1x256xf32>
    %285 = arith.addf %275, %284 : vector<1x1x256xf32>
    %c31 = arith.constant 31 : index
    %286 = memref.load %arg3[%c31] : memref<98xf32, #tpu.memory_space<smem>>
    %287 = vector.extract_strided_slice %13 {offsets = [0, 0, 67], sizes = [1, 1, 256], strides = [1, 1, 1]} : vector<1x1x358xf32> to vector<1x1x256xf32>
    %288 = vector.broadcast %286 : f32 to vector<1x1x256xf32>
    %289 = arith.mulf %288, %287 : vector<1x1x256xf32>
    %290 = arith.addf %280, %289 : vector<1x1x256xf32>
    %c80 = arith.constant 80 : index
    %291 = memref.load %arg3[%c80] : memref<98xf32, #tpu.memory_space<smem>>
    %292 = vector.extract_strided_slice %14 {offsets = [0, 0, 67], sizes = [1, 1, 256], strides = [1, 1, 1]} : vector<1x1x358xf32> to vector<1x1x256xf32>
    %293 = vector.broadcast %291 : f32 to vector<1x1x256xf32>
    %294 = arith.mulf %293, %292 : vector<1x1x256xf32>
    %295 = arith.addf %285, %294 : vector<1x1x256xf32>
    %c38 = arith.constant 38 : index
    %296 = memref.load %arg3[%c38] : memref<98xf32, #tpu.memory_space<smem>>
    %297 = vector.extract_strided_slice %13 {offsets = [0, 0, 83], sizes = [1, 1, 256], strides = [1, 1, 1]} : vector<1x1x358xf32> to vector<1x1x256xf32>
    %298 = vector.broadcast %296 : f32 to vector<1x1x256xf32>
    %299 = arith.mulf %298, %297 : vector<1x1x256xf32>
    %300 = arith.addf %290, %299 : vector<1x1x256xf32>
    %c87 = arith.constant 87 : index
    %301 = memref.load %arg3[%c87] : memref<98xf32, #tpu.memory_space<smem>>
    %302 = vector.extract_strided_slice %14 {offsets = [0, 0, 83], sizes = [1, 1, 256], strides = [1, 1, 1]} : vector<1x1x358xf32> to vector<1x1x256xf32>
    %303 = vector.broadcast %301 : f32 to vector<1x1x256xf32>
    %304 = arith.mulf %303, %302 : vector<1x1x256xf32>
    %305 = arith.addf %295, %304 : vector<1x1x256xf32>
    %c45 = arith.constant 45 : index
    %306 = memref.load %arg3[%c45] : memref<98xf32, #tpu.memory_space<smem>>
    %307 = vector.extract_strided_slice %13 {offsets = [0, 0, 99], sizes = [1, 1, 256], strides = [1, 1, 1]} : vector<1x1x358xf32> to vector<1x1x256xf32>
    %308 = vector.broadcast %306 : f32 to vector<1x1x256xf32>
    %309 = arith.mulf %308, %307 : vector<1x1x256xf32>
    %310 = arith.addf %300, %309 : vector<1x1x256xf32>
    %c94 = arith.constant 94 : index
    %311 = memref.load %arg3[%c94] : memref<98xf32, #tpu.memory_space<smem>>
    %312 = vector.extract_strided_slice %14 {offsets = [0, 0, 99], sizes = [1, 1, 256], strides = [1, 1, 1]} : vector<1x1x358xf32> to vector<1x1x256xf32>
    %313 = vector.broadcast %311 : f32 to vector<1x1x256xf32>
    %314 = arith.mulf %313, %312 : vector<1x1x256xf32>
    %315 = arith.addf %305, %314 : vector<1x1x256xf32>
    %316 = arith.addf %170, %310 : vector<1x1x256xf32>
    %317 = arith.addf %171, %315 : vector<1x1x256xf32>
    %c4 = arith.constant 4 : index
    %318 = memref.load %arg3[%c4] : memref<98xf32, #tpu.memory_space<smem>>
    %319 = vector.extract_strided_slice %13 {offsets = [0, 0, 4], sizes = [1, 1, 256], strides = [1, 1, 1]} : vector<1x1x358xf32> to vector<1x1x256xf32>
    %320 = vector.broadcast %318 : f32 to vector<1x1x256xf32>
    %321 = arith.mulf %320, %319 : vector<1x1x256xf32>
    %c53 = arith.constant 53 : index
    %322 = memref.load %arg3[%c53] : memref<98xf32, #tpu.memory_space<smem>>
    %323 = vector.extract_strided_slice %14 {offsets = [0, 0, 4], sizes = [1, 1, 256], strides = [1, 1, 1]} : vector<1x1x358xf32> to vector<1x1x256xf32>
    %324 = vector.broadcast %322 : f32 to vector<1x1x256xf32>
    %325 = arith.mulf %324, %323 : vector<1x1x256xf32>
    %c11 = arith.constant 11 : index
    %326 = memref.load %arg3[%c11] : memref<98xf32, #tpu.memory_space<smem>>
    %327 = vector.extract_strided_slice %13 {offsets = [0, 0, 20], sizes = [1, 1, 256], strides = [1, 1, 1]} : vector<1x1x358xf32> to vector<1x1x256xf32>
    %328 = vector.broadcast %326 : f32 to vector<1x1x256xf32>
    %329 = arith.mulf %328, %327 : vector<1x1x256xf32>
    %330 = arith.addf %321, %329 : vector<1x1x256xf32>
    %c60 = arith.constant 60 : index
    %331 = memref.load %arg3[%c60] : memref<98xf32, #tpu.memory_space<smem>>
    %332 = vector.extract_strided_slice %14 {offsets = [0, 0, 20], sizes = [1, 1, 256], strides = [1, 1, 1]} : vector<1x1x358xf32> to vector<1x1x256xf32>
    %333 = vector.broadcast %331 : f32 to vector<1x1x256xf32>
    %334 = arith.mulf %333, %332 : vector<1x1x256xf32>
    %335 = arith.addf %325, %334 : vector<1x1x256xf32>
    %c18 = arith.constant 18 : index
    %336 = memref.load %arg3[%c18] : memref<98xf32, #tpu.memory_space<smem>>
    %337 = vector.extract_strided_slice %13 {offsets = [0, 0, 36], sizes = [1, 1, 256], strides = [1, 1, 1]} : vector<1x1x358xf32> to vector<1x1x256xf32>
    %338 = vector.broadcast %336 : f32 to vector<1x1x256xf32>
    %339 = arith.mulf %338, %337 : vector<1x1x256xf32>
    %340 = arith.addf %330, %339 : vector<1x1x256xf32>
    %c67 = arith.constant 67 : index
    %341 = memref.load %arg3[%c67] : memref<98xf32, #tpu.memory_space<smem>>
    %342 = vector.extract_strided_slice %14 {offsets = [0, 0, 36], sizes = [1, 1, 256], strides = [1, 1, 1]} : vector<1x1x358xf32> to vector<1x1x256xf32>
    %343 = vector.broadcast %341 : f32 to vector<1x1x256xf32>
    %344 = arith.mulf %343, %342 : vector<1x1x256xf32>
    %345 = arith.addf %335, %344 : vector<1x1x256xf32>
    %c25 = arith.constant 25 : index
    %346 = memref.load %arg3[%c25] : memref<98xf32, #tpu.memory_space<smem>>
    %347 = vector.extract_strided_slice %13 {offsets = [0, 0, 52], sizes = [1, 1, 256], strides = [1, 1, 1]} : vector<1x1x358xf32> to vector<1x1x256xf32>
    %348 = vector.broadcast %346 : f32 to vector<1x1x256xf32>
    %349 = arith.mulf %348, %347 : vector<1x1x256xf32>
    %350 = arith.addf %340, %349 : vector<1x1x256xf32>
    %c74 = arith.constant 74 : index
    %351 = memref.load %arg3[%c74] : memref<98xf32, #tpu.memory_space<smem>>
    %352 = vector.extract_strided_slice %14 {offsets = [0, 0, 52], sizes = [1, 1, 256], strides = [1, 1, 1]} : vector<1x1x358xf32> to vector<1x1x256xf32>
    %353 = vector.broadcast %351 : f32 to vector<1x1x256xf32>
    %354 = arith.mulf %353, %352 : vector<1x1x256xf32>
    %355 = arith.addf %345, %354 : vector<1x1x256xf32>
    %c32 = arith.constant 32 : index
    %356 = memref.load %arg3[%c32] : memref<98xf32, #tpu.memory_space<smem>>
    %357 = vector.extract_strided_slice %13 {offsets = [0, 0, 68], sizes = [1, 1, 256], strides = [1, 1, 1]} : vector<1x1x358xf32> to vector<1x1x256xf32>
    %358 = vector.broadcast %356 : f32 to vector<1x1x256xf32>
    %359 = arith.mulf %358, %357 : vector<1x1x256xf32>
    %360 = arith.addf %350, %359 : vector<1x1x256xf32>
    %c81 = arith.constant 81 : index
    %361 = memref.load %arg3[%c81] : memref<98xf32, #tpu.memory_space<smem>>
    %362 = vector.extract_strided_slice %14 {offsets = [0, 0, 68], sizes = [1, 1, 256], strides = [1, 1, 1]} : vector<1x1x358xf32> to vector<1x1x256xf32>
    %363 = vector.broadcast %361 : f32 to vector<1x1x256xf32>
    %364 = arith.mulf %363, %362 : vector<1x1x256xf32>
    %365 = arith.addf %355, %364 : vector<1x1x256xf32>
    %c39 = arith.constant 39 : index
    %366 = memref.load %arg3[%c39] : memref<98xf32, #tpu.memory_space<smem>>
    %367 = vector.extract_strided_slice %13 {offsets = [0, 0, 84], sizes = [1, 1, 256], strides = [1, 1, 1]} : vector<1x1x358xf32> to vector<1x1x256xf32>
    %368 = vector.broadcast %366 : f32 to vector<1x1x256xf32>
    %369 = arith.mulf %368, %367 : vector<1x1x256xf32>
    %370 = arith.addf %360, %369 : vector<1x1x256xf32>
    %c88 = arith.constant 88 : index
    %371 = memref.load %arg3[%c88] : memref<98xf32, #tpu.memory_space<smem>>
    %372 = vector.extract_strided_slice %14 {offsets = [0, 0, 84], sizes = [1, 1, 256], strides = [1, 1, 1]} : vector<1x1x358xf32> to vector<1x1x256xf32>
    %373 = vector.broadcast %371 : f32 to vector<1x1x256xf32>
    %374 = arith.mulf %373, %372 : vector<1x1x256xf32>
    %375 = arith.addf %365, %374 : vector<1x1x256xf32>
    %c46 = arith.constant 46 : index
    %376 = memref.load %arg3[%c46] : memref<98xf32, #tpu.memory_space<smem>>
    %377 = vector.extract_strided_slice %13 {offsets = [0, 0, 100], sizes = [1, 1, 256], strides = [1, 1, 1]} : vector<1x1x358xf32> to vector<1x1x256xf32>
    %378 = vector.broadcast %376 : f32 to vector<1x1x256xf32>
    %379 = arith.mulf %378, %377 : vector<1x1x256xf32>
    %380 = arith.addf %370, %379 : vector<1x1x256xf32>
    %c95 = arith.constant 95 : index
    %381 = memref.load %arg3[%c95] : memref<98xf32, #tpu.memory_space<smem>>
    %382 = vector.extract_strided_slice %14 {offsets = [0, 0, 100], sizes = [1, 1, 256], strides = [1, 1, 1]} : vector<1x1x358xf32> to vector<1x1x256xf32>
    %383 = vector.broadcast %381 : f32 to vector<1x1x256xf32>
    %384 = arith.mulf %383, %382 : vector<1x1x256xf32>
    %385 = arith.addf %375, %384 : vector<1x1x256xf32>
    %c15_i32 = arith.constant 15 : i32
    %386 = vector.broadcast %c15_i32 : i32 to vector<1x1x256xi32>
    %387 = arith.cmpi slt, %15, %386 : vector<1x1x256xi32>
    %cst_38 = arith.constant 0.000000e+00 : f32
    %388 = vector.broadcast %cst_38 : f32 to vector<1x1x256xf32>
    %389 = arith.select %387, %380, %388 : vector<1x1x256xi1>, vector<1x1x256xf32>
    %cst_39 = arith.constant 0.000000e+00 : f32
    %390 = vector.broadcast %cst_39 : f32 to vector<1x1x256xf32>
    %391 = arith.select %387, %385, %390 : vector<1x1x256xi1>, vector<1x1x256xf32>
    %392 = arith.addf %246, %389 : vector<1x1x256xf32>
    %393 = arith.addf %247, %391 : vector<1x1x256xf32>
    %c5 = arith.constant 5 : index
    %394 = memref.load %arg3[%c5] : memref<98xf32, #tpu.memory_space<smem>>
    %395 = vector.extract_strided_slice %13 {offsets = [0, 0, 5], sizes = [1, 1, 256], strides = [1, 1, 1]} : vector<1x1x358xf32> to vector<1x1x256xf32>
    %396 = vector.broadcast %394 : f32 to vector<1x1x256xf32>
    %397 = arith.mulf %396, %395 : vector<1x1x256xf32>
    %c54 = arith.constant 54 : index
    %398 = memref.load %arg3[%c54] : memref<98xf32, #tpu.memory_space<smem>>
    %399 = vector.extract_strided_slice %14 {offsets = [0, 0, 5], sizes = [1, 1, 256], strides = [1, 1, 1]} : vector<1x1x358xf32> to vector<1x1x256xf32>
    %400 = vector.broadcast %398 : f32 to vector<1x1x256xf32>
    %401 = arith.mulf %400, %399 : vector<1x1x256xf32>
    %c12 = arith.constant 12 : index
    %402 = memref.load %arg3[%c12] : memref<98xf32, #tpu.memory_space<smem>>
    %403 = vector.extract_strided_slice %13 {offsets = [0, 0, 21], sizes = [1, 1, 256], strides = [1, 1, 1]} : vector<1x1x358xf32> to vector<1x1x256xf32>
    %404 = vector.broadcast %402 : f32 to vector<1x1x256xf32>
    %405 = arith.mulf %404, %403 : vector<1x1x256xf32>
    %406 = arith.addf %397, %405 : vector<1x1x256xf32>
    %c61 = arith.constant 61 : index
    %407 = memref.load %arg3[%c61] : memref<98xf32, #tpu.memory_space<smem>>
    %408 = vector.extract_strided_slice %14 {offsets = [0, 0, 21], sizes = [1, 1, 256], strides = [1, 1, 1]} : vector<1x1x358xf32> to vector<1x1x256xf32>
    %409 = vector.broadcast %407 : f32 to vector<1x1x256xf32>
    %410 = arith.mulf %409, %408 : vector<1x1x256xf32>
    %411 = arith.addf %401, %410 : vector<1x1x256xf32>
    %c19 = arith.constant 19 : index
    %412 = memref.load %arg3[%c19] : memref<98xf32, #tpu.memory_space<smem>>
    %413 = vector.extract_strided_slice %13 {offsets = [0, 0, 37], sizes = [1, 1, 256], strides = [1, 1, 1]} : vector<1x1x358xf32> to vector<1x1x256xf32>
    %414 = vector.broadcast %412 : f32 to vector<1x1x256xf32>
    %415 = arith.mulf %414, %413 : vector<1x1x256xf32>
    %416 = arith.addf %406, %415 : vector<1x1x256xf32>
    %c68 = arith.constant 68 : index
    %417 = memref.load %arg3[%c68] : memref<98xf32, #tpu.memory_space<smem>>
    %418 = vector.extract_strided_slice %14 {offsets = [0, 0, 37], sizes = [1, 1, 256], strides = [1, 1, 1]} : vector<1x1x358xf32> to vector<1x1x256xf32>
    %419 = vector.broadcast %417 : f32 to vector<1x1x256xf32>
    %420 = arith.mulf %419, %418 : vector<1x1x256xf32>
    %421 = arith.addf %411, %420 : vector<1x1x256xf32>
    %c26 = arith.constant 26 : index
    %422 = memref.load %arg3[%c26] : memref<98xf32, #tpu.memory_space<smem>>
    %423 = vector.extract_strided_slice %13 {offsets = [0, 0, 53], sizes = [1, 1, 256], strides = [1, 1, 1]} : vector<1x1x358xf32> to vector<1x1x256xf32>
    %424 = vector.broadcast %422 : f32 to vector<1x1x256xf32>
    %425 = arith.mulf %424, %423 : vector<1x1x256xf32>
    %426 = arith.addf %416, %425 : vector<1x1x256xf32>
    %c75 = arith.constant 75 : index
    %427 = memref.load %arg3[%c75] : memref<98xf32, #tpu.memory_space<smem>>
    %428 = vector.extract_strided_slice %14 {offsets = [0, 0, 53], sizes = [1, 1, 256], strides = [1, 1, 1]} : vector<1x1x358xf32> to vector<1x1x256xf32>
    %429 = vector.broadcast %427 : f32 to vector<1x1x256xf32>
    %430 = arith.mulf %429, %428 : vector<1x1x256xf32>
    %431 = arith.addf %421, %430 : vector<1x1x256xf32>
    %c33 = arith.constant 33 : index
    %432 = memref.load %arg3[%c33] : memref<98xf32, #tpu.memory_space<smem>>
    %433 = vector.extract_strided_slice %13 {offsets = [0, 0, 69], sizes = [1, 1, 256], strides = [1, 1, 1]} : vector<1x1x358xf32> to vector<1x1x256xf32>
    %434 = vector.broadcast %432 : f32 to vector<1x1x256xf32>
    %435 = arith.mulf %434, %433 : vector<1x1x256xf32>
    %436 = arith.addf %426, %435 : vector<1x1x256xf32>
    %c82 = arith.constant 82 : index
    %437 = memref.load %arg3[%c82] : memref<98xf32, #tpu.memory_space<smem>>
    %438 = vector.extract_strided_slice %14 {offsets = [0, 0, 69], sizes = [1, 1, 256], strides = [1, 1, 1]} : vector<1x1x358xf32> to vector<1x1x256xf32>
    %439 = vector.broadcast %437 : f32 to vector<1x1x256xf32>
    %440 = arith.mulf %439, %438 : vector<1x1x256xf32>
    %441 = arith.addf %431, %440 : vector<1x1x256xf32>
    %c40 = arith.constant 40 : index
    %442 = memref.load %arg3[%c40] : memref<98xf32, #tpu.memory_space<smem>>
    %443 = vector.extract_strided_slice %13 {offsets = [0, 0, 85], sizes = [1, 1, 256], strides = [1, 1, 1]} : vector<1x1x358xf32> to vector<1x1x256xf32>
    %444 = vector.broadcast %442 : f32 to vector<1x1x256xf32>
    %445 = arith.mulf %444, %443 : vector<1x1x256xf32>
    %446 = arith.addf %436, %445 : vector<1x1x256xf32>
    %c89 = arith.constant 89 : index
    %447 = memref.load %arg3[%c89] : memref<98xf32, #tpu.memory_space<smem>>
    %448 = vector.extract_strided_slice %14 {offsets = [0, 0, 85], sizes = [1, 1, 256], strides = [1, 1, 1]} : vector<1x1x358xf32> to vector<1x1x256xf32>
    %449 = vector.broadcast %447 : f32 to vector<1x1x256xf32>
    %450 = arith.mulf %449, %448 : vector<1x1x256xf32>
    %451 = arith.addf %441, %450 : vector<1x1x256xf32>
    %c47 = arith.constant 47 : index
    %452 = memref.load %arg3[%c47] : memref<98xf32, #tpu.memory_space<smem>>
    %453 = vector.extract_strided_slice %13 {offsets = [0, 0, 101], sizes = [1, 1, 256], strides = [1, 1, 1]} : vector<1x1x358xf32> to vector<1x1x256xf32>
    %454 = vector.broadcast %452 : f32 to vector<1x1x256xf32>
    %455 = arith.mulf %454, %453 : vector<1x1x256xf32>
    %456 = arith.addf %446, %455 : vector<1x1x256xf32>
    %c96 = arith.constant 96 : index
    %457 = memref.load %arg3[%c96] : memref<98xf32, #tpu.memory_space<smem>>
    %458 = vector.extract_strided_slice %14 {offsets = [0, 0, 101], sizes = [1, 1, 256], strides = [1, 1, 1]} : vector<1x1x358xf32> to vector<1x1x256xf32>
    %459 = vector.broadcast %457 : f32 to vector<1x1x256xf32>
    %460 = arith.mulf %459, %458 : vector<1x1x256xf32>
    %461 = arith.addf %451, %460 : vector<1x1x256xf32>
    %c14_i32 = arith.constant 14 : i32
    %462 = vector.broadcast %c14_i32 : i32 to vector<1x1x256xi32>
    %463 = arith.cmpi slt, %15, %462 : vector<1x1x256xi32>
    %cst_40 = arith.constant 0.000000e+00 : f32
    %464 = vector.broadcast %cst_40 : f32 to vector<1x1x256xf32>
    %465 = arith.select %463, %456, %464 : vector<1x1x256xi1>, vector<1x1x256xf32>
    %cst_41 = arith.constant 0.000000e+00 : f32
    %466 = vector.broadcast %cst_41 : f32 to vector<1x1x256xf32>
    %467 = arith.select %463, %461, %466 : vector<1x1x256xi1>, vector<1x1x256xf32>
    %468 = arith.addf %316, %465 : vector<1x1x256xf32>
    %469 = arith.addf %317, %467 : vector<1x1x256xf32>
    %c6 = arith.constant 6 : index
    %470 = memref.load %arg3[%c6] : memref<98xf32, #tpu.memory_space<smem>>
    %471 = vector.extract_strided_slice %13 {offsets = [0, 0, 6], sizes = [1, 1, 256], strides = [1, 1, 1]} : vector<1x1x358xf32> to vector<1x1x256xf32>
    %472 = vector.broadcast %470 : f32 to vector<1x1x256xf32>
    %473 = arith.mulf %472, %471 : vector<1x1x256xf32>
    %c55 = arith.constant 55 : index
    %474 = memref.load %arg3[%c55] : memref<98xf32, #tpu.memory_space<smem>>
    %475 = vector.extract_strided_slice %14 {offsets = [0, 0, 6], sizes = [1, 1, 256], strides = [1, 1, 1]} : vector<1x1x358xf32> to vector<1x1x256xf32>
    %476 = vector.broadcast %474 : f32 to vector<1x1x256xf32>
    %477 = arith.mulf %476, %475 : vector<1x1x256xf32>
    %c13 = arith.constant 13 : index
    %478 = memref.load %arg3[%c13] : memref<98xf32, #tpu.memory_space<smem>>
    %479 = vector.extract_strided_slice %13 {offsets = [0, 0, 22], sizes = [1, 1, 256], strides = [1, 1, 1]} : vector<1x1x358xf32> to vector<1x1x256xf32>
    %480 = vector.broadcast %478 : f32 to vector<1x1x256xf32>
    %481 = arith.mulf %480, %479 : vector<1x1x256xf32>
    %482 = arith.addf %473, %481 : vector<1x1x256xf32>
    %c62 = arith.constant 62 : index
    %483 = memref.load %arg3[%c62] : memref<98xf32, #tpu.memory_space<smem>>
    %484 = vector.extract_strided_slice %14 {offsets = [0, 0, 22], sizes = [1, 1, 256], strides = [1, 1, 1]} : vector<1x1x358xf32> to vector<1x1x256xf32>
    %485 = vector.broadcast %483 : f32 to vector<1x1x256xf32>
    %486 = arith.mulf %485, %484 : vector<1x1x256xf32>
    %487 = arith.addf %477, %486 : vector<1x1x256xf32>
    %c20 = arith.constant 20 : index
    %488 = memref.load %arg3[%c20] : memref<98xf32, #tpu.memory_space<smem>>
    %489 = vector.extract_strided_slice %13 {offsets = [0, 0, 38], sizes = [1, 1, 256], strides = [1, 1, 1]} : vector<1x1x358xf32> to vector<1x1x256xf32>
    %490 = vector.broadcast %488 : f32 to vector<1x1x256xf32>
    %491 = arith.mulf %490, %489 : vector<1x1x256xf32>
    %492 = arith.addf %482, %491 : vector<1x1x256xf32>
    %c69 = arith.constant 69 : index
    %493 = memref.load %arg3[%c69] : memref<98xf32, #tpu.memory_space<smem>>
    %494 = vector.extract_strided_slice %14 {offsets = [0, 0, 38], sizes = [1, 1, 256], strides = [1, 1, 1]} : vector<1x1x358xf32> to vector<1x1x256xf32>
    %495 = vector.broadcast %493 : f32 to vector<1x1x256xf32>
    %496 = arith.mulf %495, %494 : vector<1x1x256xf32>
    %497 = arith.addf %487, %496 : vector<1x1x256xf32>
    %c27 = arith.constant 27 : index
    %498 = memref.load %arg3[%c27] : memref<98xf32, #tpu.memory_space<smem>>
    %499 = vector.extract_strided_slice %13 {offsets = [0, 0, 54], sizes = [1, 1, 256], strides = [1, 1, 1]} : vector<1x1x358xf32> to vector<1x1x256xf32>
    %500 = vector.broadcast %498 : f32 to vector<1x1x256xf32>
    %501 = arith.mulf %500, %499 : vector<1x1x256xf32>
    %502 = arith.addf %492, %501 : vector<1x1x256xf32>
    %c76 = arith.constant 76 : index
    %503 = memref.load %arg3[%c76] : memref<98xf32, #tpu.memory_space<smem>>
    %504 = vector.extract_strided_slice %14 {offsets = [0, 0, 54], sizes = [1, 1, 256], strides = [1, 1, 1]} : vector<1x1x358xf32> to vector<1x1x256xf32>
    %505 = vector.broadcast %503 : f32 to vector<1x1x256xf32>
    %506 = arith.mulf %505, %504 : vector<1x1x256xf32>
    %507 = arith.addf %497, %506 : vector<1x1x256xf32>
    %c34 = arith.constant 34 : index
    %508 = memref.load %arg3[%c34] : memref<98xf32, #tpu.memory_space<smem>>
    %509 = vector.extract_strided_slice %13 {offsets = [0, 0, 70], sizes = [1, 1, 256], strides = [1, 1, 1]} : vector<1x1x358xf32> to vector<1x1x256xf32>
    %510 = vector.broadcast %508 : f32 to vector<1x1x256xf32>
    %511 = arith.mulf %510, %509 : vector<1x1x256xf32>
    %512 = arith.addf %502, %511 : vector<1x1x256xf32>
    %c83 = arith.constant 83 : index
    %513 = memref.load %arg3[%c83] : memref<98xf32, #tpu.memory_space<smem>>
    %514 = vector.extract_strided_slice %14 {offsets = [0, 0, 70], sizes = [1, 1, 256], strides = [1, 1, 1]} : vector<1x1x358xf32> to vector<1x1x256xf32>
    %515 = vector.broadcast %513 : f32 to vector<1x1x256xf32>
    %516 = arith.mulf %515, %514 : vector<1x1x256xf32>
    %517 = arith.addf %507, %516 : vector<1x1x256xf32>
    %c41 = arith.constant 41 : index
    %518 = memref.load %arg3[%c41] : memref<98xf32, #tpu.memory_space<smem>>
    %519 = vector.extract_strided_slice %13 {offsets = [0, 0, 86], sizes = [1, 1, 256], strides = [1, 1, 1]} : vector<1x1x358xf32> to vector<1x1x256xf32>
    %520 = vector.broadcast %518 : f32 to vector<1x1x256xf32>
    %521 = arith.mulf %520, %519 : vector<1x1x256xf32>
    %522 = arith.addf %512, %521 : vector<1x1x256xf32>
    %c90 = arith.constant 90 : index
    %523 = memref.load %arg3[%c90] : memref<98xf32, #tpu.memory_space<smem>>
    %524 = vector.extract_strided_slice %14 {offsets = [0, 0, 86], sizes = [1, 1, 256], strides = [1, 1, 1]} : vector<1x1x358xf32> to vector<1x1x256xf32>
    %525 = vector.broadcast %523 : f32 to vector<1x1x256xf32>
    %526 = arith.mulf %525, %524 : vector<1x1x256xf32>
    %527 = arith.addf %517, %526 : vector<1x1x256xf32>
    %c48 = arith.constant 48 : index
    %528 = memref.load %arg3[%c48] : memref<98xf32, #tpu.memory_space<smem>>
    %529 = vector.extract_strided_slice %13 {offsets = [0, 0, 102], sizes = [1, 1, 256], strides = [1, 1, 1]} : vector<1x1x358xf32> to vector<1x1x256xf32>
    %530 = vector.broadcast %528 : f32 to vector<1x1x256xf32>
    %531 = arith.mulf %530, %529 : vector<1x1x256xf32>
    %532 = arith.addf %522, %531 : vector<1x1x256xf32>
    %c97 = arith.constant 97 : index
    %533 = memref.load %arg3[%c97] : memref<98xf32, #tpu.memory_space<smem>>
    %534 = vector.extract_strided_slice %14 {offsets = [0, 0, 102], sizes = [1, 1, 256], strides = [1, 1, 1]} : vector<1x1x358xf32> to vector<1x1x256xf32>
    %535 = vector.broadcast %533 : f32 to vector<1x1x256xf32>
    %536 = arith.mulf %535, %534 : vector<1x1x256xf32>
    %537 = arith.addf %527, %536 : vector<1x1x256xf32>
    %c13_i32 = arith.constant 13 : i32
    %538 = vector.broadcast %c13_i32 : i32 to vector<1x1x256xi32>
    %539 = arith.cmpi slt, %15, %538 : vector<1x1x256xi32>
    %cst_42 = arith.constant 0.000000e+00 : f32
    %540 = vector.broadcast %cst_42 : f32 to vector<1x1x256xf32>
    %541 = arith.select %539, %532, %540 : vector<1x1x256xi1>, vector<1x1x256xf32>
    %cst_43 = arith.constant 0.000000e+00 : f32
    %542 = vector.broadcast %cst_43 : f32 to vector<1x1x256xf32>
    %543 = arith.select %539, %537, %542 : vector<1x1x256xi1>, vector<1x1x256xf32>
    %544 = arith.addf %392, %541 : vector<1x1x256xf32>
    %545 = arith.addf %393, %543 : vector<1x1x256xf32>
    %546 = arith.addf %544, %545 : vector<1x1x256xf32>
    %547 = arith.addf %468, %469 : vector<1x1x256xf32>
    %548 = arith.addf %546, %547 : vector<1x1x256xf32>
    %c0_44 = arith.constant 0 : index
    %549 = memref.load %arg4[%c0_44] : memref<1xf32, #tpu.memory_space<smem>>
    %550 = vector.broadcast %549 : f32 to vector<1x1x256xf32>
    %551 = arith.addf %548, %550 : vector<1x1x256xf32>
    %552 = arith.negf %551 : vector<1x1x256xf32>
    %553 = math.exp %552 : vector<1x1x256xf32>
    %cst_45 = arith.constant 1.000000e+00 : f32
    %554 = vector.broadcast %cst_45 : f32 to vector<1x1x256xf32>
    %555 = arith.addf %554, %553 : vector<1x1x256xf32>
    %556 = arith.divf %554, %555 : vector<1x1x256xf32>
    %c0_46 = arith.constant 0 : index
    %c0_47 = arith.constant 0 : index
    %c0_48 = arith.constant 0 : index
    %557 = vector.load %arg1[%c0_46, %c0_47, %c0_48] : memref<1x4x256xf32, #tpu.memory_space<vmem>>, vector<1x4x256xf32>
    %558 = vector.broadcast %556 : vector<1x1x256xf32> to vector<1x4x256xf32>
    %559 = arith.mulf %557, %558 : vector<1x4x256xf32>
    %c0_49 = arith.constant 0 : index
    %c0_50 = arith.constant 0 : index
    %c0_51 = arith.constant 0 : index
    %560 = vector.load %arg5[%c0_49, %c0_50, %c0_51] : memref<1x4x256xf32, #tpu.memory_space<vmem>>, vector<1x4x256xf32>
    tpu.vector_store %arg5[%c0_49, %c0_50, %c0_51], %559 {strides = array<i32>} : memref<1x4x256xf32, #tpu.memory_space<vmem>>, vector<1x4x256xf32>,
    return
  }
  func.func @transform_0(%arg0: i32) -> (i32, i32, i32) {
    %c0_i32 = arith.constant 0 : i32
    %c0_i32_0 = arith.constant 0 : i32
    %c0_i32_1 = arith.constant 0 : i32
    return %arg0, %c0_i32, %c0_i32_0 : i32, i32, i32
  }
  func.func @transform_1(%arg0: i32) -> (i32, i32, i32) {
    %c0_i32 = arith.constant 0 : i32
    %c0_i32_0 = arith.constant 0 : i32
    %c0_i32_1 = arith.constant 0 : i32
    %c0_i32_2 = arith.constant 0 : i32
    return %c0_i32, %c0_i32_0, %c0_i32_1 : i32, i32, i32
  }
  func.func @transform_2(%arg0: i32) -> i32 {
    %c0_i32 = arith.constant 0 : i32
    %c0_i32_0 = arith.constant 0 : i32
    return %c0_i32 : i32
  }
  func.func @transform_3(%arg0: i32) -> i32 {
    %c0_i32 = arith.constant 0 : i32
    %c0_i32_0 = arith.constant 0 : i32
    return %c0_i32 : i32
  }
  func.func @transform_4(%arg0: i32) -> (i32, i32, i32) {
    %c0_i32 = arith.constant 0 : i32
    %c0_i32_0 = arith.constant 0 : i32
    %c0_i32_1 = arith.constant 0 : i32
    return %arg0, %c0_i32, %c0_i32_0 : i32, i32, i32
  }
}

</mosaic_0001>

<llo_original>
// kernel: tpu_custom_call.1
$region0: #{tpu_custom_call.1}
  #allocation0 [shape = 'u32[]', space=smem, size = 0x4, offset = 0x4, fixed_abs, tag = 'smem constant byte address 0x4 - core index']
  #allocation1 [shape = 'u32[72,128]{1,0:T(1,128)}', space=vmem, size = 0x9000, scoped, tag = 'internal scratch']
  #allocation2 [shape = 'f32[1,1,358]{2,1,0:T(1,128)}', space=vmem, size = 0x600, scoped, tag = 'scratch operand']
  #allocation3 [shape = 'f32[1,1,358]{2,1,0:T(1,128)}', space=vmem, size = 0x600, scoped, tag = 'scratch operand']
  #allocation4 [shape = 'f32[1]{0:T(128)S(6)}', space=smem, size = 0x200, scoped, tag = 'scoped memory for tpu_custom_call.1']
  %s0 = inlined_call_operand.hbm [shape: f32[2,4,256], index: 0, kind: input, shape index: {}]
  %s1 = inlined_call_operand.vmem [shape: s32[1,1,256], index: 1, kind: input, shape index: {}]
  %s2 = inlined_call_operand.vmem [shape: f32[98], index: 2, kind: input, shape index: {}]
  %s3 = inlined_call_operand.<no memory space> [shape: f32[1], index: 3, kind: input, shape index: {}]
  %s4 = inlined_call_operand.hbm [shape: f32[2,4,256], index: 4, kind: output, shape index: {}]
  %s5 = sld [smem:[#allocation0]]
  $region57: #{tpu_custom_call.1} parent=0
    _
  %s7 = ssub.s32 1, %s5
  %s8 = scalar_select 0, %s7, %s5
  %9 = sst [smem:[#allocation4]] %s3
  $region1: #{tpu_custom_call.1} parent=0
    #allocation5 [shape = 'u8[8192]{0}', space=vmem, size = 0x2000, scoped, tag = 'input window, operand 0']
    #allocation6 [shape = 's32[2]{0}', space=sflag, size = 0x8, scoped, tag = 'scoped memory for tpu_custom_call.1']
    #allocation7 [shape = 's32[2]{0}', space=sflag, size = 0x8, scoped, tag = 'scoped memory for tpu_custom_call.1']
    #allocation8 [shape = 's32[2]{0}', space=sflag, size = 0x8, scoped, tag = 'scoped memory for tpu_custom_call.1']
    #allocation9 [shape = 'u8[512]{0}', space=smem, size = 0x200, scoped, tag = 'input window, operand 2, single buffered']
    #allocation10 [shape = 'u8[8192]{0}', space=vmem, size = 0x2000, scoped, tag = 'output window, operand 0']
    %10 = vsyncpa [#allocation6], 0
    %s11 = scalar_lea.sflag [#allocation6], 1
    %12 = vsyncpa %s11, 0
    %13 = vsyncpa [#allocation8], 0
    %14 = vsyncpa [#allocation7], 0
    %s15 = scalar_lea.sflag [#allocation7], 1
    %16 = vsyncpa %s15, 0
    loop: start=0, step=1, limit=4
    $region2: #{tpu_custom_call.1} parent=1 // loop_pre_header
      _
    $region3: #{tpu_custom_call.1} parent=1 // loop_header
      %s18 = sphi 0, %s22
      %p19 = scmp.ge.s32.totalorder %s18, 4
      %s28 = sphi 0, %s30
      %s31 = sphi 0, %s28
      %s32 = sphi 0, %s31
      %s48 = sphi 0, %s32
      %s52 = sphi 0, %s52
      %s54 = sphi 0, %s52
      %s55 = sphi 0, %s54
      %s69 = sphi 0, %s55
      %s73 = sphi 0, %s73
      %s75 = sphi 0, %s73
      %s76 = sphi 0, %s75
      %s90 = sphi 0, %s76
      %s94 = sphi 0, %s94
      %s96 = sphi 0, %s94
      %s97 = sphi 0, %s96
      %s111 = sphi 0, %s97
      %s117 = sphi 0, %s119
      %s120 = sphi 0, %s117
      %s121 = sphi 0, %s120
      %s137 = sphi 0, %s121
    $region4: #{tpu_custom_call.1} parent=1 // loop_header_branch
      %21 = sbr.rel (%p19) target = $region8
    $region5: #{tpu_custom_call.1} parent=1 // loop_body
      %s23 = ssub.s32 %s18, 1
      %s24 = ssub.s32 %s18, 2
      %s25 = sadd.s32 %s18, 1
      %s26 = ssub.s32 %s18, %s25
      %p27 = scmp.eq.s32.totalorder %s26, 0
      %s29 = sadd.s32 %s28, 1
      %s30 = scalar_select %p27, %s28, %s29
      %p33 = pneg %p27
      %p34 = scmp.eq.s32.totalorder %s18, 1
      %p35 = por %p33, %p34
      %p36 = scmp.ne.s32.totalorder %s28, %s31
      %p37 = scmp.eq.s32.totalorder %s18, 0
      %p38 = por %p36, %p37
      %p39 = scmp.ne.s32.totalorder %s28, %s31
      %p40 = scmp.eq.s32.totalorder %s23, 1
      %p41 = por %p39, %p40
      %p42 = scmp.ne.s32.totalorder %s31, %s32
      %p43 = scmp.eq.s32.totalorder %s23, 0
      %p44 = por %p42, %p43
      %p45 = scmp.ne.s32.totalorder %s31, %s32
      %p46 = scmp.eq.s32.totalorder %s24, 1
      %p47 = por %p45, %p46
      %p49 = scmp.ne.s32.totalorder %s32, %s48
      %p50 = scmp.eq.s32.totalorder %s24, 0
      %p51 = por %p49, %p50
      %s53 = sadd.s32 %s52, 1
      %p56 = scmp.eq.s32.totalorder %s18, 1
      %p57 = scmp.ne.s32.totalorder %s52, %s54
      %p58 = scmp.eq.s32.totalorder %s18, 0
      %p59 = por %p57, %p58
      %p60 = scmp.ne.s32.totalorder %s52, %s54
      %p61 = scmp.eq.s32.totalorder %s23, 1
      %p62 = por %p60, %p61
      %p63 = scmp.ne.s32.totalorder %s54, %s55
      %p64 = scmp.eq.s32.totalorder %s23, 0
      %p65 = por %p63, %p64
      %p66 = scmp.ne.s32.totalorder %s54, %s55
      %p67 = scmp.eq.s32.totalorder %s24, 1
      %p68 = por %p66, %p67
      %p70 = scmp.ne.s32.totalorder %s55, %s69
      %p71 = scmp.eq.s32.totalorder %s24, 0
      %p72 = por %p70, %p71
      %s74 = sadd.s32 %s73, 1
      %p77 = scmp.eq.s32.totalorder %s18, 1
      %p78 = scmp.ne.s32.totalorder %s73, %s75
      %p79 = scmp.eq.s32.totalorder %s18, 0
      %p80 = por %p78, %p79
      %p81 = scmp.ne.s32.totalorder %s73, %s75
      %p82 = scmp.eq.s32.totalorder %s23, 1
      %p83 = por %p81, %p82
      %p84 = scmp.ne.s32.totalorder %s75, %s76
      %p85 = scmp.eq.s32.totalorder %s23, 0
      %p86 = por %p84, %p85
      %p87 = scmp.ne.s32.totalorder %s75, %s76
      %p88 = scmp.eq.s32.totalorder %s24, 1
      %p89 = por %p87, %p88
      %p91 = scmp.ne.s32.totalorder %s76, %s90
      %p92 = scmp.eq.s32.totalorder %s24, 0
      %p93 = por %p91, %p92
      %s95 = sadd.s32 %s94, 1
      %p98 = scmp.eq.s32.totalorder %s18, 1
      %p99 = scmp.ne.s32.totalorder %s94, %s96
      %p100 = scmp.eq.s32.totalorder %s18, 0
      %p101 = por %p99, %p100
      %p102 = scmp.ne.s32.totalorder %s94, %s96
      %p103 = scmp.eq.s32.totalorder %s23, 1
      %p104 = por %p102, %p103
      %p105 = scmp.ne.s32.totalorder %s96, %s97
      %p106 = scmp.eq.s32.totalorder %s23, 0
      %p107 = por %p105, %p106
      %p108 = scmp.ne.s32.totalorder %s96, %s97
      %p109 = scmp.eq.s32.totalorder %s24, 1
      %p110 = por %p108, %p109
      %p112 = scmp.ne.s32.totalorder %s97, %s111
      %p113 = scmp.eq.s32.totalorder %s24, 0
      %p114 = por %p112, %p113
      %s115 = ssub.s32 %s18, %s25
      %p116 = scmp.eq.s32.totalorder %s115, 0
      %s118 = sadd.s32 %s117, 1
      %s119 = scalar_select %p116, %s117, %s118
      %p122 = pneg %p116
      %p123 = scmp.eq.s32.totalorder %s18, 1
      %p124 = por %p122, %p123
      %p125 = scmp.ne.s32.totalorder %s117, %s120
      %p126 = scmp.eq.s32.totalorder %s18, 0
      %p127 = por %p125, %p126
      %p128 = scmp.ne.s32.totalorder %s117, %s120
      %p129 = scmp.eq.s32.totalorder %s23, 1
      %p130 = por %p128, %p129
      %p131 = scmp.ne.s32.totalorder %s120, %s121
      %p132 = scmp.eq.s32.totalorder %s23, 0
      %p133 = por %p131, %p132
      %p134 = scmp.ne.s32.totalorder %s120, %s121
      %p135 = scmp.eq.s32.totalorder %s24, 1
      %p136 = por %p134, %p135
      %p138 = scmp.ne.s32.totalorder %s121, %s137
      %p139 = scmp.eq.s32.totalorder %s24, 0
      %p140 = por %p138, %p139
      %p141 = scmp.le.s32.totalorder 1, %s18
      %p142 = scmp.lt.s32.totalorder %s18, 3
      %p143 = pnand %p141, %p142
      %p144 = pneg %p143
      // Predicated region
      $region9: #{tpu_custom_call.1} parent=5 // pred_check
        _
      $region10: #{tpu_custom_call.1} parent=5 // pred_check_branch
        %146 = sbr.rel (%p143) target = $region12
      $region11: #{tpu_custom_call.1} parent=5 // pred_region
        %s147 = ssub.s32 %s18, 1
        // Predicated region
        $region13: #{tpu_custom_call.1} parent=11 // pred_check
          %p148 = pneg %p65
        $region14: #{tpu_custom_call.1} parent=11 // pred_check_branch
          %150 = sbr.rel (%p148) target = $region16
        $region15: #{tpu_custom_call.1} parent=11 // pred_region
          _
        $region16: #{tpu_custom_call.1} parent=11 // pred_fallthru
          _
        // Predicated region
        $region17: #{tpu_custom_call.1} parent=11 // pred_check
          %p151 = pneg %p86
        $region18: #{tpu_custom_call.1} parent=11 // pred_check_branch
          %153 = sbr.rel (%p151) target = $region20
        $region19: #{tpu_custom_call.1} parent=11 // pred_region
          %155 = vsyncadd [#allocation8], 0
          %s157 = sshll.u32 %s2, 4
          %s158 = int_to_ptr.vmem [resolvable:$true] %s157
          %160 = dma.vmem_to_smem %s158, 16, [#allocation9], [#allocation8]
        $region20: #{tpu_custom_call.1} parent=11 // pred_fallthru
          _
        // Predicated region
        $region21: #{tpu_custom_call.1} parent=11 // pred_check
          %p161 = pneg %p107
        $region22: #{tpu_custom_call.1} parent=11 // pred_check_branch
          %163 = sbr.rel (%p161) target = $region24
        $region23: #{tpu_custom_call.1} parent=11 // pred_region
          _
        $region24: #{tpu_custom_call.1} parent=11 // pred_fallthru
          _
      $region12: #{tpu_custom_call.1} parent=5 // pred_fallthru
        _
      %p164 = scmp.lt.s32.totalorder %s18, 2
      // Predicated region
      $region25: #{tpu_custom_call.1} parent=5 // pred_check
        %p165 = pneg %p164
      $region26: #{tpu_custom_call.1} parent=5 // pred_check_branch
        %167 = sbr.rel (%p165) target = $region28
      $region27: #{tpu_custom_call.1} parent=5 // pred_region
        // Predicated region
        $region29: #{tpu_custom_call.1} parent=27 // pred_check
          %p168 = pneg %p38
        $region30: #{tpu_custom_call.1} parent=27 // pred_check_branch
          %170 = sbr.rel (%p168) target = $region32
        $region31: #{tpu_custom_call.1} parent=27 // pred_region
          %s171 = sand.u32 %s28, 1
          %s172 = scalar_lea.sflag [#allocation6], %s171
          %s173 = sand.u32 %s28, 1
          %s174 = smul.addr %s173, 8
          %s175 = scalar_lea.vmem [#allocation5], %s174
          %177 = vsyncadd %s172, 0
          %s178 = smul.addr %s18, 2
          %s179 = smul.addr %s178, 4
          %s180 = scalar_lea.hbm %s0, %s179
          %s182 = sshll.u32 %s180, 4
          %s183 = int_to_ptr.hbm [resolvable:$true] %s182
          %s184 = sshll.u32 %s175, 4
          %s185 = int_to_ptr.vmem [resolvable:$true] %s184
          %187 = dma.hbm_to_vmem [thread:$0]  %s183, 128, %s185, %s172
        $region32: #{tpu_custom_call.1} parent=27 // pred_fallthru
          _
      $region28: #{tpu_custom_call.1} parent=5 // pred_fallthru
        _
      %p188 = scmp.le.s32.totalorder 1, %s18
      %p189 = scmp.lt.s32.totalorder %s18, 3
      %p190 = pnand %p188, %p189
      %p191 = pneg %p190
      // Predicated region
      $region33: #{tpu_custom_call.1} parent=5 // pred_check
        _
      $region34: #{tpu_custom_call.1} parent=5 // pred_check_branch
        %193 = sbr.rel (%p190) target = $region36
      $region35: #{tpu_custom_call.1} parent=5 // pred_region
        %s194 = ssub.s32 %s18, 1
        %s195 = sand.u32 %s31, 1
        %s196 = scalar_lea.sflag [#allocation6], %s195
        %s197 = sand.u32 %s31, 1
        %s198 = smul.addr %s197, 8
        %s199 = scalar_lea.vmem [#allocation5], %s198
        // Predicated region
        $region37: #{tpu_custom_call.1} parent=35 // pred_check
          %p200 = pneg %p44
        $region38: #{tpu_custom_call.1} parent=35 // pred_check_branch
          %202 = sbr.rel (%p200) target = $region40
        $region39: #{tpu_custom_call.1} parent=35 // pred_region
          %204 = dma.done %s196, 128
        $region40: #{tpu_custom_call.1} parent=35 // pred_fallthru
          _
        // Predicated region
        $region41: #{tpu_custom_call.1} parent=35 // pred_check
          %p205 = pneg %p86
        $region42: #{tpu_custom_call.1} parent=35 // pred_check_branch
          %207 = sbr.rel (%p205) target = $region44
        $region43: #{tpu_custom_call.1} parent=35 // pred_region
          %209 = dma.done [#allocation8], 16
        $region44: #{tpu_custom_call.1} parent=35 // pred_fallthru
          _
        %210 = sfence
        %s211 = sand.u32 %s31, 1
        %s212 = scalar_lea.sflag [#allocation6], %s211
        %s213 = sand.u32 %s31, 1
        %s214 = smul.addr %s213, 8
        %s215 = scalar_lea.vmem [#allocation5], %s214
        %p216 = pneg %p44
        %p217 = pneg %p41
        %p218 = pneg %p65
        %p219 = pneg %p62
        %p220 = pneg %p86
        %p221 = pneg %p83
        %p222 = pneg %p107
        %p223 = pneg %p104
        %p224 = pneg %p133
        %p225 = pneg %p130
        %s226 = sand.u32 %s120, 1
        %s227 = scalar_lea.sflag [#allocation7], %s226
        %s228 = sand.u32 %s120, 1
        %s229 = smul.addr %s228, 8
        %s230 = scalar_lea.vmem [#allocation10], %s229
        %v231 = vld [vmem:[%s199] sm:$0xff]
        %233 = vst [vmem:[#allocation1] ss:$2 sm:$0xff] %v231
        %v234 = vld.sshfl [vmem:[#allocation1] sm:$0xff pattern:$0x75316420]
        %v235 = vld.sshfl [vmem:[#allocation1 + $0x8] sm:$0xff pattern:$0x75316420]
        %vm238 = vcmask 1043456
        %v239 = vsel %vm238, %v234, -inf
        %v240 = vrot.slane %v239, 4
        %v241 = vmax.f32 %v239, %v240
        %v242 = vrot.slane %v241, 2
        %v243 = vmax.f32 %v241, %v242
        %v244 = vrot.slane %v243, 1
        %v245 = vmax.f32 %v243, %v244
        %v246 = vsel %vm238, %v235, -inf
        %v247 = vrot.slane %v246, 4
        %v248 = vmax.f32 %v246, %v247
        %v249 = vrot.slane %v248, 2
        %v250 = vmax.f32 %v248, %v249
        %v251 = vrot.slane %v250, 1
        %v252 = vmax.f32 %v250, %v251
        %253 = vst [vmem:[#allocation1] ss:$2 sm:$0xff] %v231
        %v254 = vld.sshfl [vmem:[#allocation1] sm:$0xff pattern:$0x75316420]
        %v255 = vld.sshfl [vmem:[#allocation1 + $0x8] sm:$0xff pattern:$0x75316420]
        %v258 = vsel %vm238, %v254, 0.0
        %v259 = vrot.slane %v258, 4
        %v260 = vadd.f32 %v258, %v259
        %v261 = vrot.slane %v260, 2
        %v262 = vadd.f32 %v260, %v261
        %v263 = vrot.slane %v262, 1
        %v264 = vadd.f32 %v262, %v263
        %v265 = vsel %vm238, %v255, 0.0
        %v266 = vrot.slane %v265, 4
        %v267 = vadd.f32 %v265, %v266
        %v268 = vrot.slane %v267, 2
        %v269 = vadd.f32 %v267, %v268
        %v270 = vrot.slane %v269, 1
        %v271 = vadd.f32 %v269, %v270
        %v272 = vrcp.pop 4.0
        %v273 = vmul.f32 4.0, %v272
        %v274 = vsub.f32 1.0, %v273
        %v275 = vmul.f32 %v272, %v274
        %v276 = vadd.f32 %v272, %v275
        %vm277 = vweird.f32 %v272
        %v278 = vsel %vm277, %v272, %v276
        %v279 = vmul.f32 %v264, %v278
        %v280 = vmul.f32 %v271, %v278
        %v281 = vlaneseq
        %vm282 = vcmp.ge.s32.totalorder %v281, 0
        %vm283 = vcmp.lt.s32.totalorder %v281, 358
        %vm284 = vmand %vm282, %vm283
        %285 = vst.msk [vmem:[#allocation2] sm:$0x7] %vm284, 0.0
        %286 = vst.msk [vmem:[#allocation3] sm:$0x7] %vm284, 0.0
        %v289 = vrot.slane %v252, 7
        %vm290 = vcmask 1040384
        %v291 = vsel %vm290, %v245, %v289
        %292 = vrot.lane.b32.xlu0 %v291, 51
        %v293 = vpop.permute.xlu0 %292
        %v294 = vrot.slane %v293, 7
        %vm295 = vcmask 416768
        %v296 = vsel %vm295, %v294, %v293
        %vm298 = vcmp.ge.s32.totalorder %v281, 51
        %vm299 = vcmp.lt.s32.totalorder %v281, 307
        %vm300 = vmand %vm298, %vm299
        %301 = vst.msk [vmem:[#allocation2] sm:$0x7] %vm300, %v296
        %v304 = vrot.slane %v280, 7
        %v305 = vsel %vm290, %v279, %v304
        %306 = vrot.lane.b32.xlu0 %v305, 51
        %v307 = vpop.permute.xlu0 %306
        %v308 = vrot.slane %v307, 7
        %v309 = vsel %vm295, %v308, %v307
        %311 = vst.msk [vmem:[#allocation3] sm:$0x7] %vm300, %v309
        %v312 = vld [vmem:[#allocation2] sm:$0x7]
        %v313 = vld [vmem:[#allocation3] sm:$0x7]
        %v314 = vld [vmem:[%s1] sm:$0x3]
        %s315 = sld [smem:[#allocation9]]
        %v316 = vstv %s315
        %v317 = vmul.f32 %v316, %v312
        %s318 = sld [smem:[#allocation9 + $0x31]]
        %v319 = vstv %s318
        %v320 = vmul.f32 %v319, %v313
        %s321 = sld [smem:[#allocation9 + $0x7]]
        %v322 = vstv %s321
        %v323 = vmul.f32 %v322, %v312
        %325 = vrot.lane.b32.xlu0 %v323, 112
        %v326 = vpop.permute.xlu0 %325
        %v327 = vrot.slane %v326, 1
        %vm328 = vcmask 916480
        %v329 = vsel %vm328, %v326, %v327
        %v331 = vadd.f32 %v317, %v329
        %s332 = sld [smem:[#allocation9 + $0x38]]
        %v333 = vstv %s332
        %v334 = vmul.f32 %v333, %v313
        %336 = vrot.lane.b32.xlu0 %v334, 112
        %v337 = vpop.permute.xlu0 %336
        %v338 = vrot.slane %v337, 1
        %v339 = vsel %vm328, %v337, %v338
        %v341 = vadd.f32 %v320, %v339
        %s342 = sld [smem:[#allocation9 + $0xe]]
        %v343 = vstv %s342
        %v344 = vmul.f32 %v343, %v312
        %346 = vrot.lane.b32.xlu0 %v344, 96
        %v347 = vpop.permute.xlu0 %346
        %v348 = vrot.slane %v347, 1
        %vm349 = vcmask 785408
        %v350 = vsel %vm349, %v347, %v348
        %v352 = vadd.f32 %v331, %v350
        %s353 = sld [smem:[#allocation9 + $0x3f]]
        %v354 = vstv %s353
        %v355 = vmul.f32 %v354, %v313
        %357 = vrot.lane.b32.xlu0 %v355, 96
        %v358 = vpop.permute.xlu0 %357
        %v359 = vrot.slane %v358, 1
        %v360 = vsel %vm349, %v358, %v359
        %v362 = vadd.f32 %v341, %v360
        %s363 = sld [smem:[#allocation9 + $0x15]]
        %v364 = vstv %s363
        %v365 = vmul.f32 %v364, %v312
        %367 = vrot.lane.b32.xlu0 %v365, 80
        %v368 = vpop.permute.xlu0 %367
        %v369 = vrot.slane %v368, 1
        %vm370 = vcmask 654336
        %v371 = vsel %vm370, %v368, %v369
        %v373 = vadd.f32 %v352, %v371
        %s374 = sld [smem:[#allocation9 + $0x46]]
        %v375 = vstv %s374
        %v376 = vmul.f32 %v375, %v313
        %378 = vrot.lane.b32.xlu0 %v376, 80
        %v379 = vpop.permute.xlu0 %378
        %v380 = vrot.slane %v379, 1
        %v381 = vsel %vm370, %v379, %v380
        %v383 = vadd.f32 %v362, %v381
        %s384 = sld [smem:[#allocation9 + $0x1c]]
        %v385 = vstv %s384
        %v386 = vmul.f32 %v385, %v312
        %388 = vrot.lane.b32.xlu0 %v386, 64
        %v389 = vpop.permute.xlu0 %388
        %v390 = vrot.slane %v389, 1
        %vm391 = vcmask 523264
        %v392 = vsel %vm391, %v389, %v390
        %v394 = vadd.f32 %v373, %v392
        %s395 = sld [smem:[#allocation9 + $0x4d]]
        %v396 = vstv %s395
        %v397 = vmul.f32 %v396, %v313
        %399 = vrot.lane.b32.xlu0 %v397, 64
        %v400 = vpop.permute.xlu0 %399
        %v401 = vrot.slane %v400, 1
        %v402 = vsel %vm391, %v400, %v401
        %v404 = vadd.f32 %v383, %v402
        %s405 = sld [smem:[#allocation9 + $0x23]]
        %v406 = vstv %s405
        %v407 = vmul.f32 %v406, %v312
        %409 = vrot.lane.b32.xlu0 %v407, 48
        %v410 = vpop.permute.xlu0 %409
        %v411 = vrot.slane %v410, 1
        %vm412 = vcmask 392192
        %v413 = vsel %vm412, %v410, %v411
        %v415 = vadd.f32 %v394, %v413
        %s416 = sld [smem:[#allocation9 + $0x54]]
        %v417 = vstv %s416
        %v418 = vmul.f32 %v417, %v313
        %420 = vrot.lane.b32.xlu0 %v418, 48
        %v421 = vpop.permute.xlu0 %420
        %v422 = vrot.slane %v421, 1
        %v423 = vsel %vm412, %v421, %v422
        %v425 = vadd.f32 %v404, %v423
        %s426 = sld [smem:[#allocation9 + $0x2a]]
        %v427 = vstv %s426
        %v428 = vmul.f32 %v427, %v312
        %430 = vrot.lane.b32.xlu0 %v428, 32
        %v431 = vpop.permute.xlu0 %430
        %v432 = vrot.slane %v431, 1
        %vm433 = vcmask 261120
        %v434 = vsel %vm433, %v431, %v432
        %v436 = vadd.f32 %v415, %v434
        %s437 = sld [smem:[#allocation9 + $0x5b]]
        %v438 = vstv %s437
        %v439 = vmul.f32 %v438, %v313
        %441 = vrot.lane.b32.xlu0 %v439, 32
        %v442 = vpop.permute.xlu0 %441
        %v443 = vrot.slane %v442, 1
        %v444 = vsel %vm433, %v442, %v443
        %v446 = vadd.f32 %v425, %v444
        %vm447 = vcmp.ge.s32.totalorder %v314, 3
        %v448 = vsel %vm447, %v436, 0.0
        %v449 = vsel %vm447, %v446, 0.0
        %v450 = vadd.f32 %v448, 0.0
        %v451 = vadd.f32 %v449, 0.0
        %s452 = sld [smem:[#allocation9 + $0x1]]
        %v453 = vstv %s452
        %v454 = vmul.f32 %v453, %v312
        %s455 = sld [smem:[#allocation9 + $0x32]]
        %v456 = vstv %s455
        %v457 = vmul.f32 %v456, %v313
        %s458 = sld [smem:[#allocation9 + $0x8]]
        %v459 = vstv %s458
        %v460 = vmul.f32 %v459, %v312
        %462 = vrot.lane.b32.xlu0 %v460, 112
        %v463 = vpop.permute.xlu0 %462
        %v464 = vrot.slane %v463, 1
        %v465 = vsel %vm328, %v463, %v464
        %v467 = vadd.f32 %v454, %v465
        %s468 = sld [smem:[#allocation9 + $0x39]]
        %v469 = vstv %s468
        %v470 = vmul.f32 %v469, %v313
        %472 = vrot.lane.b32.xlu0 %v470, 112
        %v473 = vpop.permute.xlu0 %472
        %v474 = vrot.slane %v473, 1
        %v475 = vsel %vm328, %v473, %v474
        %v477 = vadd.f32 %v457, %v475
        %s478 = sld [smem:[#allocation9 + $0xf]]
        %v479 = vstv %s478
        %v480 = vmul.f32 %v479, %v312
        %482 = vrot.lane.b32.xlu0 %v480, 96
        %v483 = vpop.permute.xlu0 %482
        %v484 = vrot.slane %v483, 1
        %v485 = vsel %vm349, %v483, %v484
        %v487 = vadd.f32 %v467, %v485
        %s488 = sld [smem:[#allocation9 + $0x40]]
        %v489 = vstv %s488
        %v490 = vmul.f32 %v489, %v313
        %492 = vrot.lane.b32.xlu0 %v490, 96
        %v493 = vpop.permute.xlu0 %492
        %v494 = vrot.slane %v493, 1
        %v495 = vsel %vm349, %v493, %v494
        %v497 = vadd.f32 %v477, %v495
        %s498 = sld [smem:[#allocation9 + $0x16]]
        %v499 = vstv %s498
        %v500 = vmul.f32 %v499, %v312
        %502 = vrot.lane.b32.xlu0 %v500, 80
        %v503 = vpop.permute.xlu0 %502
        %v504 = vrot.slane %v503, 1
        %v505 = vsel %vm370, %v503, %v504
        %v507 = vadd.f32 %v487, %v505
        %s508 = sld [smem:[#allocation9 + $0x47]]
        %v509 = vstv %s508
        %v510 = vmul.f32 %v509, %v313
        %512 = vrot.lane.b32.xlu0 %v510, 80
        %v513 = vpop.permute.xlu0 %512
        %v514 = vrot.slane %v513, 1
        %v515 = vsel %vm370, %v513, %v514
        %v517 = vadd.f32 %v497, %v515
        %s518 = sld [smem:[#allocation9 + $0x1d]]
        %v519 = vstv %s518
        %v520 = vmul.f32 %v519, %v312
        %522 = vrot.lane.b32.xlu0 %v520, 64
        %v523 = vpop.permute.xlu0 %522
        %v524 = vrot.slane %v523, 1
        %v525 = vsel %vm391, %v523, %v524
        %v527 = vadd.f32 %v507, %v525
        %s528 = sld [smem:[#allocation9 + $0x4e]]
        %v529 = vstv %s528
        %v530 = vmul.f32 %v529, %v313
        %532 = vrot.lane.b32.xlu0 %v530, 64
        %v533 = vpop.permute.xlu0 %532
        %v534 = vrot.slane %v533, 1
        %v535 = vsel %vm391, %v533, %v534
        %v537 = vadd.f32 %v517, %v535
        %s538 = sld [smem:[#allocation9 + $0x24]]
        %v539 = vstv %s538
        %v540 = vmul.f32 %v539, %v312
        %542 = vrot.lane.b32.xlu0 %v540, 48
        %v543 = vpop.permute.xlu0 %542
        %v544 = vrot.slane %v543, 1
        %v545 = vsel %vm412, %v543, %v544
        %v547 = vadd.f32 %v527, %v545
        %s548 = sld [smem:[#allocation9 + $0x55]]
        %v549 = vstv %s548
        %v550 = vmul.f32 %v549, %v313
        %552 = vrot.lane.b32.xlu0 %v550, 48
        %v553 = vpop.permute.xlu0 %552
        %v554 = vrot.slane %v553, 1
        %v555 = vsel %vm412, %v553, %v554
        %v557 = vadd.f32 %v537, %v555
        %s558 = sld [smem:[#allocation9 + $0x2b]]
        %v559 = vstv %s558
        %v560 = vmul.f32 %v559, %v312
        %562 = vrot.lane.b32.xlu0 %v560, 32
        %v563 = vpop.permute.xlu0 %562
        %v564 = vrot.slane %v563, 1
        %v565 = vsel %vm433, %v563, %v564
        %v567 = vadd.f32 %v547, %v565
        %s568 = sld [smem:[#allocation9 + $0x5c]]
        %v569 = vstv %s568
        %v570 = vmul.f32 %v569, %v313
        %572 = vrot.lane.b32.xlu0 %v570, 32
        %v573 = vpop.permute.xlu0 %572
        %v574 = vrot.slane %v573, 1
        %v575 = vsel %vm433, %v573, %v574
        %v577 = vadd.f32 %v557, %v575
        %vm578 = vcmp.ge.s32.totalorder %v314, 2
        %580 = vrot.lane.b32.xlu0 %v567, 127
        %v581 = vpop.permute.xlu0 %580
        %v582 = vrot.slane %v581, 1
        %vm583 = vcmask 1039360
        %v584 = vsel %vm583, %v581, %v582
        %v586 = vsel %vm578, %v584, 0.0
        %588 = vrot.lane.b32.xlu0 %v577, 127
        %v589 = vpop.permute.xlu0 %588
        %v590 = vrot.slane %v589, 1
        %v591 = vsel %vm583, %v589, %v590
        %v593 = vsel %vm578, %v591, 0.0
        %v594 = vadd.f32 %v586, 0.0
        %v595 = vadd.f32 %v593, 0.0
        %s596 = sld [smem:[#allocation9 + $0x2]]
        %v597 = vstv %s596
        %v598 = vmul.f32 %v597, %v312
        %s599 = sld [smem:[#allocation9 + $0x33]]
        %v600 = vstv %s599
        %v601 = vmul.f32 %v600, %v313
        %s602 = sld [smem:[#allocation9 + $0x9]]
        %v603 = vstv %s602
        %v604 = vmul.f32 %v603, %v312
        %606 = vrot.lane.b32.xlu0 %v604, 112
        %v607 = vpop.permute.xlu0 %606
        %v608 = vrot.slane %v607, 1
        %v609 = vsel %vm328, %v607, %v608
        %v611 = vadd.f32 %v598, %v609
        %s612 = sld [smem:[#allocation9 + $0x3a]]
        %v613 = vstv %s612
        %v614 = vmul.f32 %v613, %v313
        %616 = vrot.lane.b32.xlu0 %v614, 112
        %v617 = vpop.permute.xlu0 %616
        %v618 = vrot.slane %v617, 1
        %v619 = vsel %vm328, %v617, %v618
        %v621 = vadd.f32 %v601, %v619
        %s622 = sld [smem:[#allocation9 + $0x10]]
        %v623 = vstv %s622
        %v624 = vmul.f32 %v623, %v312
        %626 = vrot.lane.b32.xlu0 %v624, 96
        %v627 = vpop.permute.xlu0 %626
        %v628 = vrot.slane %v627, 1
        %v629 = vsel %vm349, %v627, %v628
        %v631 = vadd.f32 %v611, %v629
        %s632 = sld [smem:[#allocation9 + $0x41]]
        %v633 = vstv %s632
        %v634 = vmul.f32 %v633, %v313
        %636 = vrot.lane.b32.xlu0 %v634, 96
        %v637 = vpop.permute.xlu0 %636
        %v638 = vrot.slane %v637, 1
        %v639 = vsel %vm349, %v637, %v638
        %v641 = vadd.f32 %v621, %v639
        %s642 = sld [smem:[#allocation9 + $0x17]]
        %v643 = vstv %s642
        %v644 = vmul.f32 %v643, %v312
        %646 = vrot.lane.b32.xlu0 %v644, 80
        %v647 = vpop.permute.xlu0 %646
        %v648 = vrot.slane %v647, 1
        %v649 = vsel %vm370, %v647, %v648
        %v651 = vadd.f32 %v631, %v649
        %s652 = sld [smem:[#allocation9 + $0x48]]
        %v653 = vstv %s652
        %v654 = vmul.f32 %v653, %v313
        %656 = vrot.lane.b32.xlu0 %v654, 80
        %v657 = vpop.permute.xlu0 %656
        %v658 = vrot.slane %v657, 1
        %v659 = vsel %vm370, %v657, %v658
        %v661 = vadd.f32 %v641, %v659
        %s662 = sld [smem:[#allocation9 + $0x1e]]
        %v663 = vstv %s662
        %v664 = vmul.f32 %v663, %v312
        %666 = vrot.lane.b32.xlu0 %v664, 64
        %v667 = vpop.permute.xlu0 %666
        %v668 = vrot.slane %v667, 1
        %v669 = vsel %vm391, %v667, %v668
        %v671 = vadd.f32 %v651, %v669
        %s672 = sld [smem:[#allocation9 + $0x4f]]
        %v673 = vstv %s672
        %v674 = vmul.f32 %v673, %v313
        %676 = vrot.lane.b32.xlu0 %v674, 64
        %v677 = vpop.permute.xlu0 %676
        %v678 = vrot.slane %v677, 1
        %v679 = vsel %vm391, %v677, %v678
        %v681 = vadd.f32 %v661, %v679
        %s682 = sld [smem:[#allocation9 + $0x25]]
        %v683 = vstv %s682
        %v684 = vmul.f32 %v683, %v312
        %686 = vrot.lane.b32.xlu0 %v684, 48
        %v687 = vpop.permute.xlu0 %686
        %v688 = vrot.slane %v687, 1
        %v689 = vsel %vm412, %v687, %v688
        %v691 = vadd.f32 %v671, %v689
        %s692 = sld [smem:[#allocation9 + $0x56]]
        %v693 = vstv %s692
        %v694 = vmul.f32 %v693, %v313
        %696 = vrot.lane.b32.xlu0 %v694, 48
        %v697 = vpop.permute.xlu0 %696
        %v698 = vrot.slane %v697, 1
        %v699 = vsel %vm412, %v697, %v698
        %v701 = vadd.f32 %v681, %v699
        %s702 = sld [smem:[#allocation9 + $0x2c]]
        %v703 = vstv %s702
        %v704 = vmul.f32 %v703, %v312
        %706 = vrot.lane.b32.xlu0 %v704, 32
        %v707 = vpop.permute.xlu0 %706
        %v708 = vrot.slane %v707, 1
        %v709 = vsel %vm433, %v707, %v708
        %v711 = vadd.f32 %v691, %v709
        %s712 = sld [smem:[#allocation9 + $0x5d]]
        %v713 = vstv %s712
        %v714 = vmul.f32 %v713, %v313
        %716 = vrot.lane.b32.xlu0 %v714, 32
        %v717 = vpop.permute.xlu0 %716
        %v718 = vrot.slane %v717, 1
        %v719 = vsel %vm433, %v717, %v718
        %v721 = vadd.f32 %v701, %v719
        %vm722 = vcmp.ge.s32.totalorder %v314, 1
        %724 = vrot.lane.b32.xlu0 %v711, 126
        %v725 = vpop.permute.xlu0 %724
        %v726 = vrot.slane %v725, 1
        %vm727 = vcmask 1031168
        %v728 = vsel %vm727, %v725, %v726
        %v730 = vsel %vm722, %v728, 0.0
        %732 = vrot.lane.b32.xlu0 %v721, 126
        %v733 = vpop.permute.xlu0 %732
        %v734 = vrot.slane %v733, 1
        %v735 = vsel %vm727, %v733, %v734
        %v737 = vsel %vm722, %v735, 0.0
        %v738 = vadd.f32 %v450, %v730
        %v739 = vadd.f32 %v451, %v737
        %s740 = sld [smem:[#allocation9 + $0x3]]
        %v741 = vstv %s740
        %v742 = vmul.f32 %v741, %v312
        %s743 = sld [smem:[#allocation9 + $0x34]]
        %v744 = vstv %s743
        %v745 = vmul.f32 %v744, %v313
        %s746 = sld [smem:[#allocation9 + $0xa]]
        %v747 = vstv %s746
        %v748 = vmul.f32 %v747, %v312
        %750 = vrot.lane.b32.xlu0 %v748, 112
        %v751 = vpop.permute.xlu0 %750
        %v752 = vrot.slane %v751, 1
        %v753 = vsel %vm328, %v751, %v752
        %v755 = vadd.f32 %v742, %v753
        %s756 = sld [smem:[#allocation9 + $0x3b]]
        %v757 = vstv %s756
        %v758 = vmul.f32 %v757, %v313
        %760 = vrot.lane.b32.xlu0 %v758, 112
        %v761 = vpop.permute.xlu0 %760
        %v762 = vrot.slane %v761, 1
        %v763 = vsel %vm328, %v761, %v762
        %v765 = vadd.f32 %v745, %v763
        %s766 = sld [smem:[#allocation9 + $0x11]]
        %v767 = vstv %s766
        %v768 = vmul.f32 %v767, %v312
        %770 = vrot.lane.b32.xlu0 %v768, 96
        %v771 = vpop.permute.xlu0 %770
        %v772 = vrot.slane %v771, 1
        %v773 = vsel %vm349, %v771, %v772
        %v775 = vadd.f32 %v755, %v773
        %s776 = sld [smem:[#allocation9 + $0x42]]
        %v777 = vstv %s776
        %v778 = vmul.f32 %v777, %v313
        %780 = vrot.lane.b32.xlu0 %v778, 96
        %v781 = vpop.permute.xlu0 %780
        %v782 = vrot.slane %v781, 1
        %v783 = vsel %vm349, %v781, %v782
        %v785 = vadd.f32 %v765, %v783
        %s786 = sld [smem:[#allocation9 + $0x18]]
        %v787 = vstv %s786
        %v788 = vmul.f32 %v787, %v312
        %790 = vrot.lane.b32.xlu0 %v788, 80
        %v791 = vpop.permute.xlu0 %790
        %v792 = vrot.slane %v791, 1
        %v793 = vsel %vm370, %v791, %v792
        %v795 = vadd.f32 %v775, %v793
        %s796 = sld [smem:[#allocation9 + $0x49]]
        %v797 = vstv %s796
        %v798 = vmul.f32 %v797, %v313
        %800 = vrot.lane.b32.xlu0 %v798, 80
        %v801 = vpop.permute.xlu0 %800
        %v802 = vrot.slane %v801, 1
        %v803 = vsel %vm370, %v801, %v802
        %v805 = vadd.f32 %v785, %v803
        %s806 = sld [smem:[#allocation9 + $0x1f]]
        %v807 = vstv %s806
        %v808 = vmul.f32 %v807, %v312
        %810 = vrot.lane.b32.xlu0 %v808, 64
        %v811 = vpop.permute.xlu0 %810
        %v812 = vrot.slane %v811, 1
        %v813 = vsel %vm391, %v811, %v812
        %v815 = vadd.f32 %v795, %v813
        %s816 = sld [smem:[#allocation9 + $0x50]]
        %v817 = vstv %s816
        %v818 = vmul.f32 %v817, %v313
        %820 = vrot.lane.b32.xlu0 %v818, 64
        %v821 = vpop.permute.xlu0 %820
        %v822 = vrot.slane %v821, 1
        %v823 = vsel %vm391, %v821, %v822
        %v825 = vadd.f32 %v805, %v823
        %s826 = sld [smem:[#allocation9 + $0x26]]
        %v827 = vstv %s826
        %v828 = vmul.f32 %v827, %v312
        %830 = vrot.lane.b32.xlu0 %v828, 48
        %v831 = vpop.permute.xlu0 %830
        %v832 = vrot.slane %v831, 1
        %v833 = vsel %vm412, %v831, %v832
        %v835 = vadd.f32 %v815, %v833
        %s836 = sld [smem:[#allocation9 + $0x57]]
        %v837 = vstv %s836
        %v838 = vmul.f32 %v837, %v313
        %840 = vrot.lane.b32.xlu0 %v838, 48
        %v841 = vpop.permute.xlu0 %840
        %v842 = vrot.slane %v841, 1
        %v843 = vsel %vm412, %v841, %v842
        %v845 = vadd.f32 %v825, %v843
        %s846 = sld [smem:[#allocation9 + $0x2d]]
        %v847 = vstv %s846
        %v848 = vmul.f32 %v847, %v312
        %850 = vrot.lane.b32.xlu0 %v848, 32
        %v851 = vpop.permute.xlu0 %850
        %v852 = vrot.slane %v851, 1
        %v853 = vsel %vm433, %v851, %v852
        %v855 = vadd.f32 %v835, %v853
        %s856 = sld [smem:[#allocation9 + $0x5e]]
        %v857 = vstv %s856
        %v858 = vmul.f32 %v857, %v313
        %860 = vrot.lane.b32.xlu0 %v858, 32
        %v861 = vpop.permute.xlu0 %860
        %v862 = vrot.slane %v861, 1
        %v863 = vsel %vm433, %v861, %v862
        %v865 = vadd.f32 %v845, %v863
        %867 = vrot.lane.b32.xlu0 %v855, 125
        %v868 = vpop.permute.xlu0 %867
        %v869 = vrot.slane %v868, 1
        %vm870 = vcmask 1022976
        %v871 = vsel %vm870, %v868, %v869
        %v873 = vadd.f32 %v594, %v871
        %875 = vrot.lane.b32.xlu0 %v865, 125
        %v876 = vpop.permute.xlu0 %875
        %v877 = vrot.slane %v876, 1
        %v878 = vsel %vm870, %v876, %v877
        %v880 = vadd.f32 %v595, %v878
        %s881 = sld [smem:[#allocation9 + $0x4]]
        %v882 = vstv %s881
        %v883 = vmul.f32 %v882, %v312
        %s884 = sld [smem:[#allocation9 + $0x35]]
        %v885 = vstv %s884
        %v886 = vmul.f32 %v885, %v313
        %s887 = sld [smem:[#allocation9 + $0xb]]
        %v888 = vstv %s887
        %v889 = vmul.f32 %v888, %v312
        %891 = vrot.lane.b32.xlu0 %v889, 112
        %v892 = vpop.permute.xlu0 %891
        %v893 = vrot.slane %v892, 1
        %v894 = vsel %vm328, %v892, %v893
        %v896 = vadd.f32 %v883, %v894
        %s897 = sld [smem:[#allocation9 + $0x3c]]
        %v898 = vstv %s897
        %v899 = vmul.f32 %v898, %v313
        %901 = vrot.lane.b32.xlu0 %v899, 112
        %v902 = vpop.permute.xlu0 %901
        %v903 = vrot.slane %v902, 1
        %v904 = vsel %vm328, %v902, %v903
        %v906 = vadd.f32 %v886, %v904
        %s907 = sld [smem:[#allocation9 + $0x12]]
        %v908 = vstv %s907
        %v909 = vmul.f32 %v908, %v312
        %911 = vrot.lane.b32.xlu0 %v909, 96
        %v912 = vpop.permute.xlu0 %911
        %v913 = vrot.slane %v912, 1
        %v914 = vsel %vm349, %v912, %v913
        %v916 = vadd.f32 %v896, %v914
        %s917 = sld [smem:[#allocation9 + $0x43]]
        %v918 = vstv %s917
        %v919 = vmul.f32 %v918, %v313
        %921 = vrot.lane.b32.xlu0 %v919, 96
        %v922 = vpop.permute.xlu0 %921
        %v923 = vrot.slane %v922, 1
        %v924 = vsel %vm349, %v922, %v923
        %v926 = vadd.f32 %v906, %v924
        %s927 = sld [smem:[#allocation9 + $0x19]]
        %v928 = vstv %s927
        %v929 = vmul.f32 %v928, %v312
        %931 = vrot.lane.b32.xlu0 %v929, 80
        %v932 = vpop.permute.xlu0 %931
        %v933 = vrot.slane %v932, 1
        %v934 = vsel %vm370, %v932, %v933
        %v936 = vadd.f32 %v916, %v934
        %s937 = sld [smem:[#allocation9 + $0x4a]]
        %v938 = vstv %s937
        %v939 = vmul.f32 %v938, %v313
        %941 = vrot.lane.b32.xlu0 %v939, 80
        %v942 = vpop.permute.xlu0 %941
        %v943 = vrot.slane %v942, 1
        %v944 = vsel %vm370, %v942, %v943
        %v946 = vadd.f32 %v926, %v944
        %s947 = sld [smem:[#allocation9 + $0x20]]
        %v948 = vstv %s947
        %v949 = vmul.f32 %v948, %v312
        %951 = vrot.lane.b32.xlu0 %v949, 64
        %v952 = vpop.permute.xlu0 %951
        %v953 = vrot.slane %v952, 1
        %v954 = vsel %vm391, %v952, %v953
        %v956 = vadd.f32 %v936, %v954
        %s957 = sld [smem:[#allocation9 + $0x51]]
        %v958 = vstv %s957
        %v959 = vmul.f32 %v958, %v313
        %961 = vrot.lane.b32.xlu0 %v959, 64
        %v962 = vpop.permute.xlu0 %961
        %v963 = vrot.slane %v962, 1
        %v964 = vsel %vm391, %v962, %v963
        %v966 = vadd.f32 %v946, %v964
        %s967 = sld [smem:[#allocation9 + $0x27]]
        %v968 = vstv %s967
        %v969 = vmul.f32 %v968, %v312
        %971 = vrot.lane.b32.xlu0 %v969, 48
        %v972 = vpop.permute.xlu0 %971
        %v973 = vrot.slane %v972, 1
        %v974 = vsel %vm412, %v972, %v973
        %v976 = vadd.f32 %v956, %v974
        %s977 = sld [smem:[#allocation9 + $0x58]]
        %v978 = vstv %s977
        %v979 = vmul.f32 %v978, %v313
        %981 = vrot.lane.b32.xlu0 %v979, 48
        %v982 = vpop.permute.xlu0 %981
        %v983 = vrot.slane %v982, 1
        %v984 = vsel %vm412, %v982, %v983
        %v986 = vadd.f32 %v966, %v984
        %s987 = sld [smem:[#allocation9 + $0x2e]]
        %v988 = vstv %s987
        %v989 = vmul.f32 %v988, %v312
        %991 = vrot.lane.b32.xlu0 %v989, 32
        %v992 = vpop.permute.xlu0 %991
        %v993 = vrot.slane %v992, 1
        %v994 = vsel %vm433, %v992, %v993
        %v996 = vadd.f32 %v976, %v994
        %s997 = sld [smem:[#allocation9 + $0x5f]]
        %v998 = vstv %s997
        %v999 = vmul.f32 %v998, %v313
        %1001 = vrot.lane.b32.xlu0 %v999, 32
        %v1002 = vpop.permute.xlu0 %1001
        %v1003 = vrot.slane %v1002, 1
        %v1004 = vsel %vm433, %v1002, %v1003
        %v1006 = vadd.f32 %v986, %v1004
        %vm1007 = vcmp.lt.s32.totalorder %v314, 15
        %1009 = vrot.lane.b32.xlu0 %v996, 124
        %v1010 = vpop.permute.xlu0 %1009
        %v1011 = vrot.slane %v1010, 1
        %vm1012 = vcmask 1014784
        %v1013 = vsel %vm1012, %v1010, %v1011
        %v1015 = vsel %vm1007, %v1013, 0.0
        %1017 = vrot.lane.b32.xlu0 %v1006, 124
        %v1018 = vpop.permute.xlu0 %1017
        %v1019 = vrot.slane %v1018, 1
        %v1020 = vsel %vm1012, %v1018, %v1019
        %v1022 = vsel %vm1007, %v1020, 0.0
        %v1023 = vadd.f32 %v738, %v1015
        %v1024 = vadd.f32 %v739, %v1022
        %s1025 = sld [smem:[#allocation9 + $0x5]]
        %v1026 = vstv %s1025
        %v1027 = vmul.f32 %v1026, %v312
        %s1028 = sld [smem:[#allocation9 + $0x36]]
        %v1029 = vstv %s1028
        %v1030 = vmul.f32 %v1029, %v313
        %s1031 = sld [smem:[#allocation9 + $0xc]]
        %v1032 = vstv %s1031
        %v1033 = vmul.f32 %v1032, %v312
        %1035 = vrot.lane.b32.xlu0 %v1033, 112
        %v1036 = vpop.permute.xlu0 %1035
        %v1037 = vrot.slane %v1036, 1
        %v1038 = vsel %vm328, %v1036, %v1037
        %v1040 = vadd.f32 %v1027, %v1038
        %s1041 = sld [smem:[#allocation9 + $0x3d]]
        %v1042 = vstv %s1041
        %v1043 = vmul.f32 %v1042, %v313
        %1045 = vrot.lane.b32.xlu0 %v1043, 112
        %v1046 = vpop.permute.xlu0 %1045
        %v1047 = vrot.slane %v1046, 1
        %v1048 = vsel %vm328, %v1046, %v1047
        %v1050 = vadd.f32 %v1030, %v1048
        %s1051 = sld [smem:[#allocation9 + $0x13]]
        %v1052 = vstv %s1051
        %v1053 = vmul.f32 %v1052, %v312
        %1055 = vrot.lane.b32.xlu0 %v1053, 96
        %v1056 = vpop.permute.xlu0 %1055
        %v1057 = vrot.slane %v1056, 1
        %v1058 = vsel %vm349, %v1056, %v1057
        %v1060 = vadd.f32 %v1040, %v1058
        %s1061 = sld [smem:[#allocation9 + $0x44]]
        %v1062 = vstv %s1061
        %v1063 = vmul.f32 %v1062, %v313
        %1065 = vrot.lane.b32.xlu0 %v1063, 96
        %v1066 = vpop.permute.xlu0 %1065
        %v1067 = vrot.slane %v1066, 1
        %v1068 = vsel %vm349, %v1066, %v1067
        %v1070 = vadd.f32 %v1050, %v1068
        %s1071 = sld [smem:[#allocation9 + $0x1a]]
        %v1072 = vstv %s1071
        %v1073 = vmul.f32 %v1072, %v312
        %1075 = vrot.lane.b32.xlu0 %v1073, 80
        %v1076 = vpop.permute.xlu0 %1075
        %v1077 = vrot.slane %v1076, 1
        %v1078 = vsel %vm370, %v1076, %v1077
        %v1080 = vadd.f32 %v1060, %v1078
        %s1081 = sld [smem:[#allocation9 + $0x4b]]
        %v1082 = vstv %s1081
        %v1083 = vmul.f32 %v1082, %v313
        %1085 = vrot.lane.b32.xlu0 %v1083, 80
        %v1086 = vpop.permute.xlu0 %1085
        %v1087 = vrot.slane %v1086, 1
        %v1088 = vsel %vm370, %v1086, %v1087
        %v1090 = vadd.f32 %v1070, %v1088
        %s1091 = sld [smem:[#allocation9 + $0x21]]
        %v1092 = vstv %s1091
        %v1093 = vmul.f32 %v1092, %v312
        %1095 = vrot.lane.b32.xlu0 %v1093, 64
        %v1096 = vpop.permute.xlu0 %1095
        %v1097 = vrot.slane %v1096, 1
        %v1098 = vsel %vm391, %v1096, %v1097
        %v1100 = vadd.f32 %v1080, %v1098
        %s1101 = sld [smem:[#allocation9 + $0x52]]
        %v1102 = vstv %s1101
        %v1103 = vmul.f32 %v1102, %v313
        %1105 = vrot.lane.b32.xlu0 %v1103, 64
        %v1106 = vpop.permute.xlu0 %1105
        %v1107 = vrot.slane %v1106, 1
        %v1108 = vsel %vm391, %v1106, %v1107
        %v1110 = vadd.f32 %v1090, %v1108
        %s1111 = sld [smem:[#allocation9 + $0x28]]
        %v1112 = vstv %s1111
        %v1113 = vmul.f32 %v1112, %v312
        %1115 = vrot.lane.b32.xlu0 %v1113, 48
        %v1116 = vpop.permute.xlu0 %1115
        %v1117 = vrot.slane %v1116, 1
        %v1118 = vsel %vm412, %v1116, %v1117
        %v1120 = vadd.f32 %v1100, %v1118
        %s1121 = sld [smem:[#allocation9 + $0x59]]
        %v1122 = vstv %s1121
        %v1123 = vmul.f32 %v1122, %v313
        %1125 = vrot.lane.b32.xlu0 %v1123, 48
        %v1126 = vpop.permute.xlu0 %1125
        %v1127 = vrot.slane %v1126, 1
        %v1128 = vsel %vm412, %v1126, %v1127
        %v1130 = vadd.f32 %v1110, %v1128
        %s1131 = sld [smem:[#allocation9 + $0x2f]]
        %v1132 = vstv %s1131
        %v1133 = vmul.f32 %v1132, %v312
        %1135 = vrot.lane.b32.xlu0 %v1133, 32
        %v1136 = vpop.permute.xlu0 %1135
        %v1137 = vrot.slane %v1136, 1
        %v1138 = vsel %vm433, %v1136, %v1137
        %v1140 = vadd.f32 %v1120, %v1138
        %s1141 = sld [smem:[#allocation9 + $0x60]]
        %v1142 = vstv %s1141
        %v1143 = vmul.f32 %v1142, %v313
        %1145 = vrot.lane.b32.xlu0 %v1143, 32
        %v1146 = vpop.permute.xlu0 %1145
        %v1147 = vrot.slane %v1146, 1
        %v1148 = vsel %vm433, %v1146, %v1147
        %v1150 = vadd.f32 %v1130, %v1148
        %vm1151 = vcmp.lt.s32.totalorder %v314, 14
        %1153 = vrot.lane.b32.xlu0 %v1140, 123
        %v1154 = vpop.permute.xlu0 %1153
        %v1155 = vrot.slane %v1154, 1
        %vm1156 = vcmask 1006592
        %v1157 = vsel %vm1156, %v1154, %v1155
        %v1159 = vsel %vm1151, %v1157, 0.0
        %1161 = vrot.lane.b32.xlu0 %v1150, 123
        %v1162 = vpop.permute.xlu0 %1161
        %v1163 = vrot.slane %v1162, 1
        %v1164 = vsel %vm1156, %v1162, %v1163
        %v1166 = vsel %vm1151, %v1164, 0.0
        %v1167 = vadd.f32 %v873, %v1159
        %v1168 = vadd.f32 %v880, %v1166
        %s1169 = sld [smem:[#allocation9 + $0x6]]
        %v1170 = vstv %s1169
        %v1171 = vmul.f32 %v1170, %v312
        %s1172 = sld [smem:[#allocation9 + $0x37]]
        %v1173 = vstv %s1172
        %v1174 = vmul.f32 %v1173, %v313
        %s1175 = sld [smem:[#allocation9 + $0xd]]
        %v1176 = vstv %s1175
        %v1177 = vmul.f32 %v1176, %v312
        %1179 = vrot.lane.b32.xlu0 %v1177, 112
        %v1180 = vpop.permute.xlu0 %1179
        %v1181 = vrot.slane %v1180, 1
        %v1182 = vsel %vm328, %v1180, %v1181
        %v1184 = vadd.f32 %v1171, %v1182
        %s1185 = sld [smem:[#allocation9 + $0x3e]]
        %v1186 = vstv %s1185
        %v1187 = vmul.f32 %v1186, %v313
        %1189 = vrot.lane.b32.xlu0 %v1187, 112
        %v1190 = vpop.permute.xlu0 %1189
        %v1191 = vrot.slane %v1190, 1
        %v1192 = vsel %vm328, %v1190, %v1191
        %v1194 = vadd.f32 %v1174, %v1192
        %s1195 = sld [smem:[#allocation9 + $0x14]]
        %v1196 = vstv %s1195
        %v1197 = vmul.f32 %v1196, %v312
        %1199 = vrot.lane.b32.xlu0 %v1197, 96
        %v1200 = vpop.permute.xlu0 %1199
        %v1201 = vrot.slane %v1200, 1
        %v1202 = vsel %vm349, %v1200, %v1201
        %v1204 = vadd.f32 %v1184, %v1202
        %s1205 = sld [smem:[#allocation9 + $0x45]]
        %v1206 = vstv %s1205
        %v1207 = vmul.f32 %v1206, %v313
        %1209 = vrot.lane.b32.xlu0 %v1207, 96
        %v1210 = vpop.permute.xlu0 %1209
        %v1211 = vrot.slane %v1210, 1
        %v1212 = vsel %vm349, %v1210, %v1211
        %v1214 = vadd.f32 %v1194, %v1212
        %s1215 = sld [smem:[#allocation9 + $0x1b]]
        %v1216 = vstv %s1215
        %v1217 = vmul.f32 %v1216, %v312
        %1219 = vrot.lane.b32.xlu0 %v1217, 80
        %v1220 = vpop.permute.xlu0 %1219
        %v1221 = vrot.slane %v1220, 1
        %v1222 = vsel %vm370, %v1220, %v1221
        %v1224 = vadd.f32 %v1204, %v1222
        %s1225 = sld [smem:[#allocation9 + $0x4c]]
        %v1226 = vstv %s1225
        %v1227 = vmul.f32 %v1226, %v313
        %1229 = vrot.lane.b32.xlu0 %v1227, 80
        %v1230 = vpop.permute.xlu0 %1229
        %v1231 = vrot.slane %v1230, 1
        %v1232 = vsel %vm370, %v1230, %v1231
        %v1234 = vadd.f32 %v1214, %v1232
        %s1235 = sld [smem:[#allocation9 + $0x22]]
        %v1236 = vstv %s1235
        %v1237 = vmul.f32 %v1236, %v312
        %1239 = vrot.lane.b32.xlu0 %v1237, 64
        %v1240 = vpop.permute.xlu0 %1239
        %v1241 = vrot.slane %v1240, 1
        %v1242 = vsel %vm391, %v1240, %v1241
        %v1244 = vadd.f32 %v1224, %v1242
        %s1245 = sld [smem:[#allocation9 + $0x53]]
        %v1246 = vstv %s1245
        %v1247 = vmul.f32 %v1246, %v313
        %1249 = vrot.lane.b32.xlu0 %v1247, 64
        %v1250 = vpop.permute.xlu0 %1249
        %v1251 = vrot.slane %v1250, 1
        %v1252 = vsel %vm391, %v1250, %v1251
        %v1254 = vadd.f32 %v1234, %v1252
        %s1255 = sld [smem:[#allocation9 + $0x29]]
        %v1256 = vstv %s1255
        %v1257 = vmul.f32 %v1256, %v312
        %1259 = vrot.lane.b32.xlu0 %v1257, 48
        %v1260 = vpop.permute.xlu0 %1259
        %v1261 = vrot.slane %v1260, 1
        %v1262 = vsel %vm412, %v1260, %v1261
        %v1264 = vadd.f32 %v1244, %v1262
        %s1265 = sld [smem:[#allocation9 + $0x5a]]
        %v1266 = vstv %s1265
        %v1267 = vmul.f32 %v1266, %v313
        %1269 = vrot.lane.b32.xlu0 %v1267, 48
        %v1270 = vpop.permute.xlu0 %1269
        %v1271 = vrot.slane %v1270, 1
        %v1272 = vsel %vm412, %v1270, %v1271
        %v1274 = vadd.f32 %v1254, %v1272
        %s1275 = sld [smem:[#allocation9 + $0x30]]
        %v1276 = vstv %s1275
        %v1277 = vmul.f32 %v1276, %v312
        %1279 = vrot.lane.b32.xlu0 %v1277, 32
        %v1280 = vpop.permute.xlu0 %1279
        %v1281 = vrot.slane %v1280, 1
        %v1282 = vsel %vm433, %v1280, %v1281
        %v1284 = vadd.f32 %v1264, %v1282
        %s1285 = sld [smem:[#allocation9 + $0x61]]
        %v1286 = vstv %s1285
        %v1287 = vmul.f32 %v1286, %v313
        %1289 = vrot.lane.b32.xlu0 %v1287, 32
        %v1290 = vpop.permute.xlu0 %1289
        %v1291 = vrot.slane %v1290, 1
        %v1292 = vsel %vm433, %v1290, %v1291
        %v1294 = vadd.f32 %v1274, %v1292
        %vm1295 = vcmp.lt.s32.totalorder %v314, 13
        %1297 = vrot.lane.b32.xlu0 %v1284, 122
        %v1298 = vpop.permute.xlu0 %1297
        %v1299 = vrot.slane %v1298, 1
        %vm1300 = vcmask 998400
        %v1301 = vsel %vm1300, %v1298, %v1299
        %v1303 = vsel %vm1295, %v1301, 0.0
        %1305 = vrot.lane.b32.xlu0 %v1294, 122
        %v1306 = vpop.permute.xlu0 %1305
        %v1307 = vrot.slane %v1306, 1
        %v1308 = vsel %vm1300, %v1306, %v1307
        %v1310 = vsel %vm1295, %v1308, 0.0
        %v1311 = vadd.f32 %v1023, %v1303
        %v1312 = vadd.f32 %v1024, %v1310
        %v1313 = vadd.f32 %v1311, %v1312
        %v1314 = vadd.f32 %v1167, %v1168
        %v1315 = vadd.f32 %v1313, %v1314
        %s1316 = sld [smem:[#allocation4]]
        %v1317 = vstv %s1316
        %v1318 = vadd.f32 %v1315, %v1317
        %v1319 = vxor.u32 %v1318, 2147483648
        %v1320 = vmul.f32 %v1319, 1.442695
        %v1321 = vpow.pop %v1320
        %v1322 = vadd.f32 %v1321, 1.0
        %v1323 = vrcp.pop %v1322
        %v1324 = vmul.f32 %v1322, %v1323
        %v1325 = vsub.f32 1.0, %v1324
        %v1326 = vmul.f32 %v1323, %v1325
        %v1327 = vadd.f32 %v1323, %v1326
        %vm1328 = vweird.f32 %v1322
        %vm1329 = vweird.f32 %v1323
        %vm1330 = vmor %vm1328, %vm1329
        %v1331 = vsel %vm1330, %v1323, %v1327
        %v1332 = vand.u32 2147483647, %v1322
        %vm1333 = vcmp.eq.f32.partialorder %v1332, 8.507059e+37
        %v1334 = vand.u32 %v1322, 2147483648
        %v1335 = vor.u32 1.1754944e-38, %v1334
        %v1336 = vsel %vm1333, %v1335, %v1331
        %v1337 = vmul.f32 1.0, %v1336
        %v1338 = vld [vmem:[%s199] sm:$0xff]
        %v1340 = vperm.slane %v1337, 0
        %v1341 = vperm.slane %v1337, 1
        %v1342 = vrot.slane %v1341, 4
        %v1343 = vsel %vm238, %v1340, %v1342
        %v1345 = vmul.f32 %v1338, %v1343
        %1346 = vst [vmem:[%s230] sm:$0xff] %v1345
        %s1347 = sand.u32 %s120, 1
        %s1348 = scalar_lea.sflag [#allocation7], %s1347
        %s1349 = sand.u32 %s120, 1
        %s1350 = smul.addr %s1349, 8
        %s1351 = scalar_lea.vmem [#allocation10], %s1350
        // Predicated region
        $region45: #{tpu_custom_call.1} parent=35 // pred_check
          %p1352 = pneg %p130
        $region46: #{tpu_custom_call.1} parent=35 // pred_check_branch
          %1354 = sbr.rel (%p1352) target = $region48
        $region47: #{tpu_custom_call.1} parent=35 // pred_region
          %1356 = vsyncadd %s1348, 0
          %s1357 = smul.addr %s23, 2
          %s1358 = smul.addr %s1357, 4
          %s1359 = scalar_lea.hbm %s4, %s1358
          %s1361 = sshll.u32 %s1351, 4
          %s1362 = int_to_ptr.vmem [resolvable:$true] %s1361
          %s1363 = sshll.u32 %s1359, 4
          %s1364 = int_to_ptr.hbm [resolvable:$true] %s1363
          %1366 = dma.vmem_to_hbm [thread:$0]  %s1362, 128, %s1364, %s1348
        $region48: #{tpu_custom_call.1} parent=35 // pred_fallthru
          _
      $region36: #{tpu_custom_call.1} parent=5 // pred_fallthru
        _
      %p1367 = scmp.le.s32.totalorder 2, %s18
      // Predicated region
      $region49: #{tpu_custom_call.1} parent=5 // pred_check
        %p1368 = pneg %p1367
      $region50: #{tpu_custom_call.1} parent=5 // pred_check_branch
        %1370 = sbr.rel (%p1368) target = $region52
      $region51: #{tpu_custom_call.1} parent=5 // pred_region
        %s1371 = ssub.s32 %s18, 2
        // Predicated region
        $region53: #{tpu_custom_call.1} parent=51 // pred_check
          %p1372 = pneg %p136
        $region54: #{tpu_custom_call.1} parent=51 // pred_check_branch
          %1374 = sbr.rel (%p1372) target = $region56
        $region55: #{tpu_custom_call.1} parent=51 // pred_region
          %s1375 = sand.u32 %s121, 1
          %s1376 = scalar_lea.sflag [#allocation7], %s1375
          %s1377 = sand.u32 %s121, 1
          %s1378 = smul.addr %s1377, 8
          %s1379 = scalar_lea.vmem [#allocation10], %s1378
          %1381 = dma.done %s1376, 128
        $region56: #{tpu_custom_call.1} parent=51 // pred_fallthru
          _
      $region52: #{tpu_custom_call.1} parent=5 // pred_fallthru
        _
    $region6: #{tpu_custom_call.1} parent=1 // loop_footer
      %s22 = sadd.s32 1, %s18
    $region7: #{tpu_custom_call.1} parent=1 // loop_footer_branch
      %17 = sbr.rel target = $region3
    $region8: #{tpu_custom_call.1} parent=1 // loop_exit
      _
    %1382 = vsyncpa [#allocation6], 1
    %s1383 = scalar_lea.sflag [#allocation6], 1
    %1384 = vsyncpa %s1383, 1
    %1385 = vsyncpa [#allocation7], 1
    %s1386 = scalar_lea.sflag [#allocation7], 1
    %1387 = vsyncpa %s1386, 1
    %1388 = vsyncpa [#allocation8], 1
    %s1389 = scalar_lea.sflag [#allocation8], 1
    %1390 = vsyncpa %s1389, 1

</llo_original>
